<compile_context>
chip_gen: v6e
topology: v6e:2x2x1
jax: 0.10.0
libtpu: 0.0.40
codegen_flags: <defaults>
</compile_context>

<pallas_src>
import functools

import jax
import jax.numpy as jnp
from jax.experimental import pallas as pl
from jax.experimental.pallas import tpu as pltpu

NUM_CLASSES = 10
PAD_CLASSES = 128  # pad final output dim to 128 lanes for lane-dense stores; slice outside.


def fcn_kernel(x_ref, w1_ref, b1_ref, w2_ref, b2_ref, w3_ref, b3_ref, o_ref):
    # In-kernel bf16 cast of the streamed activation tile (no separate HBM cast pass).
    x = x_ref[...].astype(jnp.bfloat16)
    # Layer 1: [TB, 1024]bf16 @ [1024, 512]bf16 -> f32 acc; bias + ReLU in f32 (VPU).
    h1 = jnp.dot(x, w1_ref[...], preferred_element_type=jnp.float32)
    h1 = jnp.maximum(h1 + b1_ref[...], 0.0)
    # (Dropout p=0.2 -> identity in eval mode)
    # Layer 2: [TB, 512]bf16 @ [512, 128]bf16 -> f32 acc; bias + ReLU in f32.
    h2 = jnp.dot(h1.astype(jnp.bfloat16), w2_ref[...], preferred_element_type=jnp.float32)
    h2 = jnp.maximum(h2 + b2_ref[...], 0.0)
    # (Dropout p=0.2 -> identity in eval mode)
    # Layer 3: [TB, 128]bf16 @ [128, PAD_CLASSES]bf16 -> f32 acc; bias in f32; store bf16.
    out = jnp.dot(h2.astype(jnp.bfloat16), w3_ref[...], preferred_element_type=jnp.float32)
    o_ref[...] = (out + b3_ref[...]).astype(o_ref.dtype)


def prepare_params(params):
    """One-time conversion of f32 Linear params into kernel-ready form.

    Weights -> bf16 (MXU operands), biases stay f32, final layer zero-padded to 128 lanes.
    Call once; reuse the result for every forward pass.
    """
    w1, b1, w2, b2, w3, b3 = params
    w3p = jnp.zeros((128, PAD_CLASSES), jnp.float32).at[:, : w3.shape[1]].set(w3)
    b3p = jnp.zeros((1, PAD_CLASSES), jnp.float32).at[:, : b3.shape[1]].set(b3)
    return (
        w1.astype(jnp.bfloat16),
        b1.astype(jnp.float32),
        w2.astype(jnp.bfloat16),
        b2.astype(jnp.float32),
        w3p.astype(jnp.bfloat16),
        b3p.astype(jnp.float32),
    )


def _round_up(n, m):
    return ((n + m - 1) // m) * m


def _resident_spec(shape):
    # Constant-index weight/bias blocks: stay resident in VMEM, single-buffered.
    return pl.BlockSpec(shape, lambda i: (0,) * len(shape), pipeline_mode=pl.Buffered(1))


@functools.partial(jax.jit, static_argnames=("tile_b",))
def fcn_forward(x, prepared, *, tile_b=512):
    """x: [B, 1024] float32 (or bf16). Returns [B, NUM_CLASSES] float32."""
    w1, b1, w2, b2, w3p, b3p = prepared
    B, d_in = x.shape
    assert d_in == 1024

    # Single grid step for small batches (grid is a serial loop on 1-TC parts); a large
    # default tile amortizes the ~0.35 us per-step overhead for big batches. Ragged
    # batches use a partial (masked-store) last block instead of a padded HBM copy.
    tb = min(int(tile_b), _round_up(B, 8))
    grid = pl.cdiv(B, tb)

    weight_bytes = sum(int(a.size) * a.dtype.itemsize for a in (w1, b1, w2, b2, w3p, b3p))
    cost = pl.CostEstimate(
        flops=2 * B * (1024 * 512 + 512 * 128 + 128 * PAD_CLASSES),
        transcendentals=0,
        bytes_accessed=B * 1024 * x.dtype.itemsize + B * PAD_CLASSES * 2 + weight_bytes,
    )

    out_padded = pl.pallas_call(
        fcn_kernel,
        out_shape=jax.ShapeDtypeStruct((B, PAD_CLASSES), jnp.bfloat16),
        grid_spec=pltpu.PrefetchScalarGridSpec(
            num_scalar_prefetch=0,
            grid=(grid,),
            in_specs=[
                pl.BlockSpec((tb, 1024), lambda i: (i, 0)),      # x tile (streamed, double-buffered)
                _resident_spec((1024, 512)),                      # W1
                _resident_spec((1, 512)),                         # b1
                _resident_spec((512, 128)),                       # W2
                _resident_spec((1, 128)),                         # b2
                _resident_spec((128, PAD_CLASSES)),               # W3 (padded)
                _resident_spec((1, PAD_CLASSES)),                 # b3 (padded)
            ],
            out_specs=pl.BlockSpec((tb, PAD_CLASSES), lambda i: (i, 0)),
        ),
        compiler_params=pltpu.CompilerParams(
            dimension_semantics=("parallel",),
        ),
        cost_estimate=cost,
    )(x, w1, b1, w2, b2, w3p, b3p)

    return out_padded[:, :NUM_CLASSES].astype(jnp.float32)


def init_params(key, num_classes=NUM_CLASSES):
    """Deterministic init mimicking torch.nn.Linear default (uniform +/- 1/sqrt(fan_in))."""
    dims = [(1024, 512), (512, 128), (128, num_classes)]
    params = []
    for fan_in, fan_out in dims:
        key, kw, kb = jax.random.split(key, 3)
        bound = 1.0 / jnp.sqrt(fan_in)
        w = jax.random.uniform(kw, (fan_in, fan_out), jnp.float32, -bound, bound)
        b = jax.random.uniform(kb, (1, fan_out), jnp.float32, -bound, bound)
        params += [w, b]
    return tuple(params)


def fcn_reference(x, prepared):
    """Pure-JAX reference matching the kernel math (bf16 operands, f32 accumulate, bf16 store)."""
    w1, b1, w2, b2, w3p, b3p = prepared
    f32 = jnp.float32
    h = x.astype(jnp.bfloat16).astype(f32) @ w1.astype(f32) + b1
    h = jnp.maximum(h, 0.0)
    h = h.astype(jnp.bfloat16).astype(f32) @ w2.astype(f32) + b2
    h = jnp.maximum(h, 0.0)
    out = h.astype(jnp.bfloat16).astype(f32) @ w3p.astype(f32) + b3p
    out = out.astype(jnp.bfloat16).astype(f32)
    return out[:, :NUM_CLASSES]


if __name__ == "__main__":
    key = jax.random.PRNGKey(0)
    key, kx1, kx2, kx3 = jax.random.split(key, 4)
    params = init_params(key)
    prepared = prepare_params(params)

    # Case 1: tiny batch (single grid step, partial-row block padded to sublane multiple).
    B1 = 8
    x1 = jax.random.normal(kx1, (B1, 1024), jnp.float32)
    out1 = jax.block_until_ready(fcn_forward(x1, prepared))
    ref1 = fcn_reference(x1, prepared)
    assert out1.shape == (B1, NUM_CLASSES), out1.shape
    assert jnp.allclose(out1, ref1, atol=3e-2, rtol=3e-2), float(jnp.abs(out1 - ref1).max())

    # Case 2: multi-step pipelined grid (3 tiles of 16 rows).
    B2 = 48
    x2 = jax.random.normal(kx2, (B2, 1024), jnp.float32)
    out2 = jax.block_until_ready(fcn_forward(x2, prepared, tile_b=16))
    ref2 = fcn_reference(x2, prepared)
    assert out2.shape == (B2, NUM_CLASSES), out2.shape
    assert jnp.allclose(out2, ref2, atol=3e-2, rtol=3e-2), float(jnp.abs(out2 - ref2).max())

    # Case 3: ragged batch -> partial last block, masked output store, no padded HBM copy.
    B3 = 50
    x3 = jax.random.normal(kx3, (B3, 1024), jnp.float32)
    out3 = jax.block_until_ready(fcn_forward(x3, prepared, tile_b=16))
    ref3 = fcn_reference(x3, prepared)
    assert out3.shape == (B3, NUM_CLASSES), out3.shape
    assert jnp.allclose(out3, ref3, atol=3e-2, rtol=3e-2), float(jnp.abs(out3 - ref3).max())

    print("KERNEL_OK")
</pallas_src>

<mosaic_0001>
module attributes {stable_mosaic.version = 11 : i64} {
  func.func @fcn_kernel(%arg0: i32, %arg1: memref<8x1024xf32, #tpu.memory_space<vmem>>, %arg2: memref<1024x512xbf16, #tpu.memory_space<vmem>>, %arg3: memref<1x512xf32, #tpu.memory_space<vmem>>, %arg4: memref<512x128xbf16, #tpu.memory_space<vmem>>, %arg5: memref<1x128xf32, #tpu.memory_space<vmem>>, %arg6: memref<128x128xbf16, #tpu.memory_space<vmem>>, %arg7: memref<1x128xf32, #tpu.memory_space<vmem>>, %arg8: memref<8x128xbf16, #tpu.memory_space<vmem>>) attributes {dimension_semantics = [#tpu.dimension_semantics<parallel>], iteration_bounds = array<i64: 1>, scalar_prefetch = 0 : i64, scratch_operands = 0 : i64, tpu.core_type = #tpu.core_type<tc>, window_params = [{transform_indices = @transform_0, window_bounds = array<i64: 8, 1024>}, {pipeline_mode = #tpu.pipeline_mode<synchronous>, transform_indices = @transform_1, window_bounds = array<i64: 1024, 512>}, {pipeline_mode = #tpu.pipeline_mode<synchronous>, transform_indices = @transform_2, window_bounds = array<i64: 1, 512>}, {pipeline_mode = #tpu.pipeline_mode<synchronous>, transform_indices = @transform_3, window_bounds = array<i64: 512, 128>}, {pipeline_mode = #tpu.pipeline_mode<synchronous>, transform_indices = @transform_4, window_bounds = array<i64: 1, 128>}, {pipeline_mode = #tpu.pipeline_mode<synchronous>, transform_indices = @transform_5, window_bounds = array<i64: 128, 128>}, {pipeline_mode = #tpu.pipeline_mode<synchronous>, transform_indices = @transform_6, window_bounds = array<i64: 1, 128>}, {transform_indices = @transform_7, window_bounds = array<i64: 8, 128>}]} {
    %c0 = arith.constant 0 : index
    %c0_0 = arith.constant 0 : index
    %0 = vector.load %arg1[%c0, %c0_0] : memref<8x1024xf32, #tpu.memory_space<vmem>>, vector<8x1024xf32>
    %1 = arith.truncf %0 : vector<8x1024xf32> to vector<8x1024xbf16>
    %c0_1 = arith.constant 0 : index
    %c0_2 = arith.constant 0 : index
    %2 = vector.load %arg2[%c0_1, %c0_2] : memref<1024x512xbf16, #tpu.memory_space<vmem>>, vector<1024x512xbf16>
    %cst = arith.constant dense<0.000000e+00> : vector<8x512xf32>
    %3 = tpu.matmul %1, %2, %cst {dimension_numbers = #tpu.dot_dimension_numbers<[1], [0], [0], [1], [0, 0, 1, 1], [], []>} : vector<8x1024xbf16>, vector<1024x512xbf16>, vector<8x512xf32> -> vector<8x512xf32>
    %c0_3 = arith.constant 0 : index
    %c0_4 = arith.constant 0 : index
    %4 = vector.load %arg3[%c0_3, %c0_4] : memref<1x512xf32, #tpu.memory_space<vmem>>, vector<1x512xf32>
    %5 = vector.broadcast %4 : vector<1x512xf32> to vector<8x512xf32>
    %6 = arith.addf %3, %5 : vector<8x512xf32>
    %cst_5 = arith.constant 0.000000e+00 : f32
    %7 = vector.broadcast %cst_5 : f32 to vector<8x512xf32>
    %8 = arith.maximumf %6, %7 : vector<8x512xf32>
    %9 = arith.truncf %8 : vector<8x512xf32> to vector<8x512xbf16>
    %c0_6 = arith.constant 0 : index
    %c0_7 = arith.constant 0 : index
    %10 = vector.load %arg4[%c0_6, %c0_7] : memref<512x128xbf16, #tpu.memory_space<vmem>>, vector<512x128xbf16>
    %cst_8 = arith.constant dense<0.000000e+00> : vector<8x128xf32>
    %11 = tpu.matmul %9, %10, %cst_8 {dimension_numbers = #tpu.dot_dimension_numbers<[1], [0], [0], [1], [0, 0, 1, 1], [], []>} : vector<8x512xbf16>, vector<512x128xbf16>, vector<8x128xf32> -> vector<8x128xf32>
    %c0_9 = arith.constant 0 : index
    %c0_10 = arith.constant 0 : index
    %12 = vector.load %arg5[%c0_9, %c0_10] : memref<1x128xf32, #tpu.memory_space<vmem>>, vector<1x128xf32>
    %13 = vector.broadcast %12 : vector<1x128xf32> to vector<8x128xf32>
    %14 = arith.addf %11, %13 : vector<8x128xf32>
    %cst_11 = arith.constant 0.000000e+00 : f32
    %15 = vector.broadcast %cst_11 : f32 to vector<8x128xf32>
    %16 = arith.maximumf %14, %15 : vector<8x128xf32>
    %17 = arith.truncf %16 : vector<8x128xf32> to vector<8x128xbf16>
    %c0_12 = arith.constant 0 : index
    %c0_13 = arith.constant 0 : index
    %18 = vector.load %arg6[%c0_12, %c0_13] : memref<128x128xbf16, #tpu.memory_space<vmem>>, vector<128x128xbf16>
    %cst_14 = arith.constant dense<0.000000e+00> : vector<8x128xf32>
    %19 = tpu.matmul %17, %18, %cst_14 {dimension_numbers = #tpu.dot_dimension_numbers<[1], [0], [0], [1], [0, 0, 1, 1], [], []>} : vector<8x128xbf16>, vector<128x128xbf16>, vector<8x128xf32> -> vector<8x128xf32>
    %c0_15 = arith.constant 0 : index
    %c0_16 = arith.constant 0 : index
    %20 = vector.load %arg7[%c0_15, %c0_16] : memref<1x128xf32, #tpu.memory_space<vmem>>, vector<1x128xf32>
    %21 = vector.broadcast %20 : vector<1x128xf32> to vector<8x128xf32>
    %22 = arith.addf %19, %21 : vector<8x128xf32>
    %23 = arith.truncf %22 : vector<8x128xf32> to vector<8x128xbf16>
    %c0_17 = arith.constant 0 : index
    %c0_18 = arith.constant 0 : index
    %24 = vector.load %arg8[%c0_17, %c0_18] : memref<8x128xbf16, #tpu.memory_space<vmem>>, vector<8x128xbf16>
    tpu.vector_store %arg8[%c0_17, %c0_18], %23 {strides = array<i32>} : memref<8x128xbf16, #tpu.memory_space<vmem>>, vector<8x128xbf16>,
    return
  }
  func.func @transform_0(%arg0: i32) -> (i32, i32) {
    %c0_i32 = arith.constant 0 : i32
    %c0_i32_0 = arith.constant 0 : i32
    return %arg0, %c0_i32 : i32, i32
  }
  func.func @transform_1(%arg0: i32) -> (i32, i32) {
    %c0_i32 = arith.constant 0 : i32
    %c0_i32_0 = arith.constant 0 : i32
    %c0_i32_1 = arith.constant 0 : i32
    return %c0_i32, %c0_i32_0 : i32, i32
  }
  func.func @transform_2(%arg0: i32) -> (i32, i32) {
    %c0_i32 = arith.constant 0 : i32
    %c0_i32_0 = arith.constant 0 : i32
    %c0_i32_1 = arith.constant 0 : i32
    return %c0_i32, %c0_i32_0 : i32, i32
  }
  func.func @transform_3(%arg0: i32) -> (i32, i32) {
    %c0_i32 = arith.constant 0 : i32
    %c0_i32_0 = arith.constant 0 : i32
    %c0_i32_1 = arith.constant 0 : i32
    return %c0_i32, %c0_i32_0 : i32, i32
  }
  func.func @transform_4(%arg0: i32) -> (i32, i32) {
    %c0_i32 = arith.constant 0 : i32
    %c0_i32_0 = arith.constant 0 : i32
    %c0_i32_1 = arith.constant 0 : i32
    return %c0_i32, %c0_i32_0 : i32, i32
  }
  func.func @transform_5(%arg0: i32) -> (i32, i32) {
    %c0_i32 = arith.constant 0 : i32
    %c0_i32_0 = arith.constant 0 : i32
    %c0_i32_1 = arith.constant 0 : i32
    return %c0_i32, %c0_i32_0 : i32, i32
  }
  func.func @transform_6(%arg0: i32) -> (i32, i32) {
    %c0_i32 = arith.constant 0 : i32
    %c0_i32_0 = arith.constant 0 : i32
    %c0_i32_1 = arith.constant 0 : i32
    return %c0_i32, %c0_i32_0 : i32, i32
  }
  func.func @transform_7(%arg0: i32) -> (i32, i32) {
    %c0_i32 = arith.constant 0 : i32
    %c0_i32_0 = arith.constant 0 : i32
    return %arg0, %c0_i32 : i32, i32
  }
}

</mosaic_0001>

<llo_original>
// kernel: fcn_forward.1
$region0: #{fcn_forward.1}
  #allocation0 [shape = 'u32[]', space=smem, size = 0x4, offset = 0x4, fixed_abs, tag = 'smem constant byte address 0x4 - core index']
  #allocation1 [shape = 'u32[144,128]{1,0:T(1,128)}', space=vmem, size = 0x12000, scoped, tag = 'internal scratch']
  %s0 = inlined_call_operand.hbm [shape: f32[8,1024], index: 0, kind: input, shape index: {}]
  %s1 = inlined_call_operand.hbm [shape: bf16[1024,512], index: 1, kind: input, shape index: {}]
  %s2 = inlined_call_operand.hbm [shape: f32[1,512], index: 2, kind: input, shape index: {}]
  %s3 = inlined_call_operand.hbm [shape: bf16[512,128], index: 3, kind: input, shape index: {}]
  %s4 = inlined_call_operand.vmem [shape: f32[1,128], index: 4, kind: input, shape index: {}]
  %s5 = inlined_call_operand.hbm [shape: bf16[128,128], index: 5, kind: input, shape index: {}]
  %s6 = inlined_call_operand.vmem [shape: f32[1,128], index: 6, kind: input, shape index: {}]
  %s7 = inlined_call_operand.vmem [shape: bf16[8,128], index: 7, kind: output, shape index: {}]
  %s8 = sld [smem:[#allocation0]]
  $region58: #{fcn_forward.1} parent=0
    _
  %s10 = ssub.s32 1, %s8
  %s11 = scalar_select 0, %s10, %s8
  $region1: #{fcn_forward.1} parent=0
    #allocation2 [shape = 'u8[32768]{0}', space=vmem, size = 0x8000, scoped, tag = 'input window, operand 0, single buffered']
    #allocation3 [shape = 's32[1]{0}', space=sflag, size = 0x4, scoped, tag = 'scoped memory for fcn_forward.1']
    #allocation4 [shape = 'u8[1048576]{0}', space=vmem, size = 0x100000, scoped, tag = 'input window, operand 1, single buffered']
    #allocation5 [shape = 's32[1]{0}', space=sflag, size = 0x4, scoped, tag = 'scoped memory for fcn_forward.1']
    #allocation6 [shape = 'u8[2048]{0}', space=vmem, size = 0x800, scoped, tag = 'input window, operand 2, single buffered']
    #allocation7 [shape = 'u8[131072]{0}', space=vmem, size = 0x20000, scoped, tag = 'input window, operand 3, single buffered']
    #allocation8 [shape = 's32[1]{0}', space=sflag, size = 0x4, scoped, tag = 'scoped memory for fcn_forward.1']
    #allocation9 [shape = 'u8[32768]{0}', space=vmem, size = 0x8000, scoped, tag = 'input window, operand 5, single buffered']
    %12 = vsyncpa [#allocation3], 0
    %13 = vsyncpa [#allocation5], 0
    %14 = vsyncpa [#allocation8], 0
    // Predicated region
    $region2: #{fcn_forward.1} parent=1 // pred_check
      _
    $region3: #{fcn_forward.1} parent=1 // pred_check_branch
      %16 = sbr.rel (0) target = $region5
    $region4: #{fcn_forward.1} parent=1 // pred_region
      %s18 = ssub.s32 1024, 1024
      %19 = vsyncadd [#allocation3], %s18
      %s21 = sshll.u32 [#allocation2], 4
      %s22 = int_to_ptr.vmem [resolvable:$true] %s21
      %24 = dma.hbm_to_vmem [thread:$0]  %s0, 1024, %s22, [#allocation3]
    $region5: #{fcn_forward.1} parent=1 // pred_fallthru
      _
    // Predicated region
    $region6: #{fcn_forward.1} parent=1 // pred_check
      _
    $region7: #{fcn_forward.1} parent=1 // pred_check_branch
      %26 = sbr.rel (0) target = $region9
    $region8: #{fcn_forward.1} parent=1 // pred_region
      %s28 = ssub.s32 32768, 32768
      %29 = vsyncadd [#allocation5], %s28
      %s30 = sshll.u32 [#allocation4], 4
      %s31 = int_to_ptr.vmem [resolvable:$true] %s30
      %36 = dma.hbm_to_vmem [thread:$0]  %s1, 32768, %s31, [#allocation5], 256, 256, 16
    $region9: #{fcn_forward.1} parent=1 // pred_fallthru
      _
    // Predicated region
    $region10: #{fcn_forward.1} parent=1 // pred_check
      _
    $region11: #{fcn_forward.1} parent=1 // pred_check_branch
      %38 = sbr.rel (0) target = $region13
    $region12: #{fcn_forward.1} parent=1 // pred_region
      %s40 = ssub.s32 64, 64
      %41 = vsyncadd [#allocation5], %s40
      %s43 = sshll.u32 [#allocation6], 4
      %s44 = int_to_ptr.vmem [resolvable:$true] %s43
      %46 = dma.hbm_to_vmem [thread:$0]  %s2, 64, %s44, [#allocation5]
    $region13: #{fcn_forward.1} parent=1 // pred_fallthru
      _
    // Predicated region
    $region14: #{fcn_forward.1} parent=1 // pred_check
      _
    $region15: #{fcn_forward.1} parent=1 // pred_check_branch
      %48 = sbr.rel (0) target = $region17
    $region16: #{fcn_forward.1} parent=1 // pred_region
      %s50 = ssub.s32 4096, 4096
      %51 = vsyncadd [#allocation8], %s50
      %s52 = sshll.u32 [#allocation7], 4
      %s53 = int_to_ptr.vmem [resolvable:$true] %s52
      %58 = dma.hbm_to_vmem [thread:$0]  %s3, 4096, %s53, [#allocation8], 64, 64, 4
    $region17: #{fcn_forward.1} parent=1 // pred_fallthru
      _
    // Predicated region
    $region18: #{fcn_forward.1} parent=1 // pred_check
      _
    $region19: #{fcn_forward.1} parent=1 // pred_check_branch
      %60 = sbr.rel (0) target = $region21
    $region20: #{fcn_forward.1} parent=1 // pred_region
      _
    $region21: #{fcn_forward.1} parent=1 // pred_fallthru
      _
    // Predicated region
    $region22: #{fcn_forward.1} parent=1 // pred_check
      _
    $region23: #{fcn_forward.1} parent=1 // pred_check_branch
      %62 = sbr.rel (0) target = $region25
    $region24: #{fcn_forward.1} parent=1 // pred_region
      %s64 = ssub.s32 1024, 1024
      %65 = vsyncadd [#allocation8], %s64
      %s66 = sshll.u32 [#allocation9], 4
      %s67 = int_to_ptr.vmem [resolvable:$true] %s66
      %72 = dma.hbm_to_vmem [thread:$0]  %s5, 1024, %s67, [#allocation8], 64, 64, 4
    $region25: #{fcn_forward.1} parent=1 // pred_fallthru
      _
    // Predicated region
    $region26: #{fcn_forward.1} parent=1 // pred_check
      _
    $region27: #{fcn_forward.1} parent=1 // pred_check_branch
      %74 = sbr.rel (0) target = $region29
    $region28: #{fcn_forward.1} parent=1 // pred_region
      _
    $region29: #{fcn_forward.1} parent=1 // pred_fallthru
      _
    // Predicated region
    $region30: #{fcn_forward.1} parent=1 // pred_check
      _
    $region31: #{fcn_forward.1} parent=1 // pred_check_branch
      %76 = sbr.rel (0) target = $region33
    $region32: #{fcn_forward.1} parent=1 // pred_region
      %77 = dma.done [#allocation3], 1024
    $region33: #{fcn_forward.1} parent=1 // pred_fallthru
      _
    // Predicated region
    $region34: #{fcn_forward.1} parent=1 // pred_check
      _
    $region35: #{fcn_forward.1} parent=1 // pred_check_branch
      %79 = sbr.rel (0) target = $region37
    $region36: #{fcn_forward.1} parent=1 // pred_region
      %80 = dma.done [#allocation5], 32768
    $region37: #{fcn_forward.1} parent=1 // pred_fallthru
      _
    // Predicated region
    $region38: #{fcn_forward.1} parent=1 // pred_check
      _
    $region39: #{fcn_forward.1} parent=1 // pred_check_branch
      %82 = sbr.rel (0) target = $region41
    $region40: #{fcn_forward.1} parent=1 // pred_region
      %83 = dma.done [#allocation5], 64
    $region41: #{fcn_forward.1} parent=1 // pred_fallthru
      _
    // Predicated region
    $region42: #{fcn_forward.1} parent=1 // pred_check
      _
    $region43: #{fcn_forward.1} parent=1 // pred_check_branch
      %85 = sbr.rel (0) target = $region45
    $region44: #{fcn_forward.1} parent=1 // pred_region
      %86 = dma.done [#allocation8], 4096
    $region45: #{fcn_forward.1} parent=1 // pred_fallthru
      _
    // Predicated region
    $region46: #{fcn_forward.1} parent=1 // pred_check
      _
    $region47: #{fcn_forward.1} parent=1 // pred_check_branch
      %88 = sbr.rel (0) target = $region49
    $region48: #{fcn_forward.1} parent=1 // pred_region
      %89 = dma.done [#allocation8], 1024
    $region49: #{fcn_forward.1} parent=1 // pred_fallthru
      _
    %v91 = vld [vmem:[#allocation2] sm:$0xff]
    %v92 = vld [vmem:[#allocation2 + $0x8] sm:$0xff]
    %v93 = vld [vmem:[#allocation2 + $0x10] sm:$0xff]
    %v94 = vld [vmem:[#allocation2 + $0x18] sm:$0xff]
    %v95 = vld [vmem:[#allocation2 + $0x20] sm:$0xff]
    %v96 = vld [vmem:[#allocation2 + $0x28] sm:$0xff]
    %v97 = vld [vmem:[#allocation2 + $0x30] sm:$0xff]
    %v98 = vld [vmem:[#allocation2 + $0x38] sm:$0xff]
    %v99 = vpack.c.bf16 %v91, %v91
    %v100 = vpack.c.bf16 %v92, %v92
    %v101 = vpack.c.bf16 %v93, %v93
    %v102 = vpack.c.bf16 %v94, %v94
    %v103 = vpack.c.bf16 %v95, %v95
    %v104 = vpack.c.bf16 %v96, %v96
    %v105 = vpack.c.bf16 %v97, %v97
    %v106 = vpack.c.bf16 %v98, %v98
    %v107 = vld [vmem:[#allocation4] sm:$0xff]
    %v108 = vld [vmem:[#allocation4 + $0x8] sm:$0xff]
    %v109 = vld [vmem:[#allocation4 + $0x10] sm:$0xff]
    %v110 = vld [vmem:[#allocation4 + $0x18] sm:$0xff]
    %v111 = vld [vmem:[#allocation4 + $0x20] sm:$0xff]
    %v112 = vld [vmem:[#allocation4 + $0x28] sm:$0xff]
    %v113 = vld [vmem:[#allocation4 + $0x30] sm:$0xff]
    %v114 = vld [vmem:[#allocation4 + $0x38] sm:$0xff]
    %v115 = vld [vmem:[#allocation4 + $0x40] sm:$0xff]
    %v116 = vld [vmem:[#allocation4 + $0x48] sm:$0xff]
    %v117 = vld [vmem:[#allocation4 + $0x50] sm:$0xff]
    %v118 = vld [vmem:[#allocation4 + $0x58] sm:$0xff]
    %v119 = vld [vmem:[#allocation4 + $0x60] sm:$0xff]
    %v120 = vld [vmem:[#allocation4 + $0x68] sm:$0xff]
    %v121 = vld [vmem:[#allocation4 + $0x70] sm:$0xff]
    %v122 = vld [vmem:[#allocation4 + $0x78] sm:$0xff]
    %v123 = vld [vmem:[#allocation4 + $0x80] sm:$0xff]
    %v124 = vld [vmem:[#allocation4 + $0x88] sm:$0xff]
    %v125 = vld [vmem:[#allocation4 + $0x90] sm:$0xff]
    %v126 = vld [vmem:[#allocation4 + $0x98] sm:$0xff]
    %v127 = vld [vmem:[#allocation4 + $0xa0] sm:$0xff]
    %v128 = vld [vmem:[#allocation4 + $0xa8] sm:$0xff]
    %v129 = vld [vmem:[#allocation4 + $0xb0] sm:$0xff]
    %v130 = vld [vmem:[#allocation4 + $0xb8] sm:$0xff]
    %v131 = vld [vmem:[#allocation4 + $0xc0] sm:$0xff]
    %v132 = vld [vmem:[#allocation4 + $0xc8] sm:$0xff]
    %v133 = vld [vmem:[#allocation4 + $0xd0] sm:$0xff]
    %v134 = vld [vmem:[#allocation4 + $0xd8] sm:$0xff]
    %v135 = vld [vmem:[#allocation4 + $0xe0] sm:$0xff]
    %v136 = vld [vmem:[#allocation4 + $0xe8] sm:$0xff]
    %v137 = vld [vmem:[#allocation4 + $0xf0] sm:$0xff]
    %v138 = vld [vmem:[#allocation4 + $0xf8] sm:$0xff]
    %v139 = vld [vmem:[#allocation4 + $0x100] sm:$0xff]
    %v140 = vld [vmem:[#allocation4 + $0x108] sm:$0xff]
    %v141 = vld [vmem:[#allocation4 + $0x110] sm:$0xff]
    %v142 = vld [vmem:[#allocation4 + $0x118] sm:$0xff]
    %v143 = vld [vmem:[#allocation4 + $0x120] sm:$0xff]
    %v144 = vld [vmem:[#allocation4 + $0x128] sm:$0xff]
    %v145 = vld [vmem:[#allocation4 + $0x130] sm:$0xff]
    %v146 = vld [vmem:[#allocation4 + $0x138] sm:$0xff]
    %v147 = vld [vmem:[#allocation4 + $0x140] sm:$0xff]
    %v148 = vld [vmem:[#allocation4 + $0x148] sm:$0xff]
    %v149 = vld [vmem:[#allocation4 + $0x150] sm:$0xff]
    %v150 = vld [vmem:[#allocation4 + $0x158] sm:$0xff]
    %v151 = vld [vmem:[#allocation4 + $0x160] sm:$0xff]
    %v152 = vld [vmem:[#allocation4 + $0x168] sm:$0xff]
    %v153 = vld [vmem:[#allocation4 + $0x170] sm:$0xff]
    %v154 = vld [vmem:[#allocation4 + $0x178] sm:$0xff]
    %v155 = vld [vmem:[#allocation4 + $0x180] sm:$0xff]
    %v156 = vld [vmem:[#allocation4 + $0x188] sm:$0xff]
    %v157 = vld [vmem:[#allocation4 + $0x190] sm:$0xff]
    %v158 = vld [vmem:[#allocation4 + $0x198] sm:$0xff]
    %v159 = vld [vmem:[#allocation4 + $0x1a0] sm:$0xff]
    %v160 = vld [vmem:[#allocation4 + $0x1a8] sm:$0xff]
    %v161 = vld [vmem:[#allocation4 + $0x1b0] sm:$0xff]
    %v162 = vld [vmem:[#allocation4 + $0x1b8] sm:$0xff]
    %v163 = vld [vmem:[#allocation4 + $0x1c0] sm:$0xff]
    %v164 = vld [vmem:[#allocation4 + $0x1c8] sm:$0xff]
    %v165 = vld [vmem:[#allocation4 + $0x1d0] sm:$0xff]
    %v166 = vld [vmem:[#allocation4 + $0x1d8] sm:$0xff]
    %v167 = vld [vmem:[#allocation4 + $0x1e0] sm:$0xff]
    %v168 = vld [vmem:[#allocation4 + $0x1e8] sm:$0xff]
    %v169 = vld [vmem:[#allocation4 + $0x1f0] sm:$0xff]
    %v170 = vld [vmem:[#allocation4 + $0x1f8] sm:$0xff]
    %v171 = vld [vmem:[#allocation4 + $0x200] sm:$0xff]
    %v172 = vld [vmem:[#allocation4 + $0x208] sm:$0xff]
    %v173 = vld [vmem:[#allocation4 + $0x210] sm:$0xff]
    %v174 = vld [vmem:[#allocation4 + $0x218] sm:$0xff]
    %v175 = vld [vmem:[#allocation4 + $0x220] sm:$0xff]
    %v176 = vld [vmem:[#allocation4 + $0x228] sm:$0xff]
    %v177 = vld [vmem:[#allocation4 + $0x230] sm:$0xff]
    %v178 = vld [vmem:[#allocation4 + $0x238] sm:$0xff]
    %v179 = vld [vmem:[#allocation4 + $0x240] sm:$0xff]
    %v180 = vld [vmem:[#allocation4 + $0x248] sm:$0xff]
    %v181 = vld [vmem:[#allocation4 + $0x250] sm:$0xff]
    %v182 = vld [vmem:[#allocation4 + $0x258] sm:$0xff]
    %v183 = vld [vmem:[#allocation4 + $0x260] sm:$0xff]
    %v184 = vld [vmem:[#allocation4 + $0x268] sm:$0xff]
    %v185 = vld [vmem:[#allocation4 + $0x270] sm:$0xff]
    %v186 = vld [vmem:[#allocation4 + $0x278] sm:$0xff]
    %v187 = vld [vmem:[#allocation4 + $0x280] sm:$0xff]
    %v188 = vld [vmem:[#allocation4 + $0x288] sm:$0xff]
    %v189 = vld [vmem:[#allocation4 + $0x290] sm:$0xff]
    %v190 = vld [vmem:[#allocation4 + $0x298] sm:$0xff]
    %v191 = vld [vmem:[#allocation4 + $0x2a0] sm:$0xff]
    %v192 = vld [vmem:[#allocation4 + $0x2a8] sm:$0xff]
    %v193 = vld [vmem:[#allocation4 + $0x2b0] sm:$0xff]
    %v194 = vld [vmem:[#allocation4 + $0x2b8] sm:$0xff]
    %v195 = vld [vmem:[#allocation4 + $0x2c0] sm:$0xff]
    %v196 = vld [vmem:[#allocation4 + $0x2c8] sm:$0xff]
    %v197 = vld [vmem:[#allocation4 + $0x2d0] sm:$0xff]
    %v198 = vld [vmem:[#allocation4 + $0x2d8] sm:$0xff]
    %v199 = vld [vmem:[#allocation4 + $0x2e0] sm:$0xff]
    %v200 = vld [vmem:[#allocation4 + $0x2e8] sm:$0xff]
    %v201 = vld [vmem:[#allocation4 + $0x2f0] sm:$0xff]
    %v202 = vld [vmem:[#allocation4 + $0x2f8] sm:$0xff]
    %v203 = vld [vmem:[#allocation4 + $0x300] sm:$0xff]
    %v204 = vld [vmem:[#allocation4 + $0x308] sm:$0xff]
    %v205 = vld [vmem:[#allocation4 + $0x310] sm:$0xff]
    %v206 = vld [vmem:[#allocation4 + $0x318] sm:$0xff]
    %v207 = vld [vmem:[#allocation4 + $0x320] sm:$0xff]
    %v208 = vld [vmem:[#allocation4 + $0x328] sm:$0xff]
    %v209 = vld [vmem:[#allocation4 + $0x330] sm:$0xff]
    %v210 = vld [vmem:[#allocation4 + $0x338] sm:$0xff]
    %v211 = vld [vmem:[#allocation4 + $0x340] sm:$0xff]
    %v212 = vld [vmem:[#allocation4 + $0x348] sm:$0xff]
    %v213 = vld [vmem:[#allocation4 + $0x350] sm:$0xff]
    %v214 = vld [vmem:[#allocation4 + $0x358] sm:$0xff]
    %v215 = vld [vmem:[#allocation4 + $0x360] sm:$0xff]
    %v216 = vld [vmem:[#allocation4 + $0x368] sm:$0xff]
    %v217 = vld [vmem:[#allocation4 + $0x370] sm:$0xff]
    %v218 = vld [vmem:[#allocation4 + $0x378] sm:$0xff]
    %v219 = vld [vmem:[#allocation4 + $0x380] sm:$0xff]
    %v220 = vld [vmem:[#allocation4 + $0x388] sm:$0xff]
    %v221 = vld [vmem:[#allocation4 + $0x390] sm:$0xff]
    %v222 = vld [vmem:[#allocation4 + $0x398] sm:$0xff]
    %v223 = vld [vmem:[#allocation4 + $0x3a0] sm:$0xff]
    %v224 = vld [vmem:[#allocation4 + $0x3a8] sm:$0xff]
    %v225 = vld [vmem:[#allocation4 + $0x3b0] sm:$0xff]
    %v226 = vld [vmem:[#allocation4 + $0x3b8] sm:$0xff]
    %v227 = vld [vmem:[#allocation4 + $0x3c0] sm:$0xff]
    %v228 = vld [vmem:[#allocation4 + $0x3c8] sm:$0xff]
    %v229 = vld [vmem:[#allocation4 + $0x3d0] sm:$0xff]
    %v230 = vld [vmem:[#allocation4 + $0x3d8] sm:$0xff]
    %v231 = vld [vmem:[#allocation4 + $0x3e0] sm:$0xff]
    %v232 = vld [vmem:[#allocation4 + $0x3e8] sm:$0xff]
    %v233 = vld [vmem:[#allocation4 + $0x3f0] sm:$0xff]
    %v234 = vld [vmem:[#allocation4 + $0x3f8] sm:$0xff]
    %v235 = vld [vmem:[#allocation4 + $0x400] sm:$0xff]
    %v236 = vld [vmem:[#allocation4 + $0x408] sm:$0xff]
    %v237 = vld [vmem:[#allocation4 + $0x410] sm:$0xff]
    %v238 = vld [vmem:[#allocation4 + $0x418] sm:$0xff]
    %v239 = vld [vmem:[#allocation4 + $0x420] sm:$0xff]
    %v240 = vld [vmem:[#allocation4 + $0x428] sm:$0xff]
    %v241 = vld [vmem:[#allocation4 + $0x430] sm:$0xff]
    %v242 = vld [vmem:[#allocation4 + $0x438] sm:$0xff]
    %v243 = vld [vmem:[#allocation4 + $0x440] sm:$0xff]
    %v244 = vld [vmem:[#allocation4 + $0x448] sm:$0xff]
    %v245 = vld [vmem:[#allocation4 + $0x450] sm:$0xff]
    %v246 = vld [vmem:[#allocation4 + $0x458] sm:$0xff]
    %v247 = vld [vmem:[#allocation4 + $0x460] sm:$0xff]
    %v248 = vld [vmem:[#allocation4 + $0x468] sm:$0xff]
    %v249 = vld [vmem:[#allocation4 + $0x470] sm:$0xff]
    %v250 = vld [vmem:[#allocation4 + $0x478] sm:$0xff]
    %v251 = vld [vmem:[#allocation4 + $0x480] sm:$0xff]
    %v252 = vld [vmem:[#allocation4 + $0x488] sm:$0xff]
    %v253 = vld [vmem:[#allocation4 + $0x490] sm:$0xff]
    %v254 = vld [vmem:[#allocation4 + $0x498] sm:$0xff]
    %v255 = vld [vmem:[#allocation4 + $0x4a0] sm:$0xff]
    %v256 = vld [vmem:[#allocation4 + $0x4a8] sm:$0xff]
    %v257 = vld [vmem:[#allocation4 + $0x4b0] sm:$0xff]
    %v258 = vld [vmem:[#allocation4 + $0x4b8] sm:$0xff]
    %v259 = vld [vmem:[#allocation4 + $0x4c0] sm:$0xff]
    %v260 = vld [vmem:[#allocation4 + $0x4c8] sm:$0xff]
    %v261 = vld [vmem:[#allocation4 + $0x4d0] sm:$0xff]
    %v262 = vld [vmem:[#allocation4 + $0x4d8] sm:$0xff]
    %v263 = vld [vmem:[#allocation4 + $0x4e0] sm:$0xff]
    %v264 = vld [vmem:[#allocation4 + $0x4e8] sm:$0xff]
    %v265 = vld [vmem:[#allocation4 + $0x4f0] sm:$0xff]
    %v266 = vld [vmem:[#allocation4 + $0x4f8] sm:$0xff]
    %v267 = vld [vmem:[#allocation4 + $0x500] sm:$0xff]
    %v268 = vld [vmem:[#allocation4 + $0x508] sm:$0xff]
    %v269 = vld [vmem:[#allocation4 + $0x510] sm:$0xff]
    %v270 = vld [vmem:[#allocation4 + $0x518] sm:$0xff]
    %v271 = vld [vmem:[#allocation4 + $0x520] sm:$0xff]
    %v272 = vld [vmem:[#allocation4 + $0x528] sm:$0xff]
    %v273 = vld [vmem:[#allocation4 + $0x530] sm:$0xff]
    %v274 = vld [vmem:[#allocation4 + $0x538] sm:$0xff]
    %v275 = vld [vmem:[#allocation4 + $0x540] sm:$0xff]
    %v276 = vld [vmem:[#allocation4 + $0x548] sm:$0xff]
    %v277 = vld [vmem:[#allocation4 + $0x550] sm:$0xff]
    %v278 = vld [vmem:[#allocation4 + $0x558] sm:$0xff]
    %v279 = vld [vmem:[#allocation4 + $0x560] sm:$0xff]
    %v280 = vld [vmem:[#allocation4 + $0x568] sm:$0xff]
    %v281 = vld [vmem:[#allocation4 + $0x570] sm:$0xff]
    %v282 = vld [vmem:[#allocation4 + $0x578] sm:$0xff]
    %v283 = vld [vmem:[#allocation4 + $0x580] sm:$0xff]
    %v284 = vld [vmem:[#allocation4 + $0x588] sm:$0xff]
    %v285 = vld [vmem:[#allocation4 + $0x590] sm:$0xff]
    %v286 = vld [vmem:[#allocation4 + $0x598] sm:$0xff]
    %v287 = vld [vmem:[#allocation4 + $0x5a0] sm:$0xff]
    %v288 = vld [vmem:[#allocation4 + $0x5a8] sm:$0xff]
    %v289 = vld [vmem:[#allocation4 + $0x5b0] sm:$0xff]
    %v290 = vld [vmem:[#allocation4 + $0x5b8] sm:$0xff]
    %v291 = vld [vmem:[#allocation4 + $0x5c0] sm:$0xff]
    %v292 = vld [vmem:[#allocation4 + $0x5c8] sm:$0xff]
    %v293 = vld [vmem:[#allocation4 + $0x5d0] sm:$0xff]
    %v294 = vld [vmem:[#allocation4 + $0x5d8] sm:$0xff]
    %v295 = vld [vmem:[#allocation4 + $0x5e0] sm:$0xff]
    %v296 = vld [vmem:[#allocation4 + $0x5e8] sm:$0xff]
    %v297 = vld [vmem:[#allocation4 + $0x5f0] sm:$0xff]
    %v298 = vld [vmem:[#allocation4 + $0x5f8] sm:$0xff]
    %v299 = vld [vmem:[#allocation4 + $0x600] sm:$0xff]
    %v300 = vld [vmem:[#allocation4 + $0x608] sm:$0xff]
    %v301 = vld [vmem:[#allocation4 + $0x610] sm:$0xff]
    %v302 = vld [vmem:[#allocation4 + $0x618] sm:$0xff]
    %v303 = vld [vmem:[#allocation4 + $0x620] sm:$0xff]
    %v304 = vld [vmem:[#allocation4 + $0x628] sm:$0xff]
    %v305 = vld [vmem:[#allocation4 + $0x630] sm:$0xff]
    %v306 = vld [vmem:[#allocation4 + $0x638] sm:$0xff]
    %v307 = vld [vmem:[#allocation4 + $0x640] sm:$0xff]
    %v308 = vld [vmem:[#allocation4 + $0x648] sm:$0xff]
    %v309 = vld [vmem:[#allocation4 + $0x650] sm:$0xff]
    %v310 = vld [vmem:[#allocation4 + $0x658] sm:$0xff]
    %v311 = vld [vmem:[#allocation4 + $0x660] sm:$0xff]
    %v312 = vld [vmem:[#allocation4 + $0x668] sm:$0xff]
    %v313 = vld [vmem:[#allocation4 + $0x670] sm:$0xff]
    %v314 = vld [vmem:[#allocation4 + $0x678] sm:$0xff]
    %v315 = vld [vmem:[#allocation4 + $0x680] sm:$0xff]
    %v316 = vld [vmem:[#allocation4 + $0x688] sm:$0xff]
    %v317 = vld [vmem:[#allocation4 + $0x690] sm:$0xff]
    %v318 = vld [vmem:[#allocation4 + $0x698] sm:$0xff]
    %v319 = vld [vmem:[#allocation4 + $0x6a0] sm:$0xff]
    %v320 = vld [vmem:[#allocation4 + $0x6a8] sm:$0xff]
    %v321 = vld [vmem:[#allocation4 + $0x6b0] sm:$0xff]
    %v322 = vld [vmem:[#allocation4 + $0x6b8] sm:$0xff]
    %v323 = vld [vmem:[#allocation4 + $0x6c0] sm:$0xff]
    %v324 = vld [vmem:[#allocation4 + $0x6c8] sm:$0xff]
    %v325 = vld [vmem:[#allocation4 + $0x6d0] sm:$0xff]
    %v326 = vld [vmem:[#allocation4 + $0x6d8] sm:$0xff]
    %v327 = vld [vmem:[#allocation4 + $0x6e0] sm:$0xff]
    %v328 = vld [vmem:[#allocation4 + $0x6e8] sm:$0xff]
    %v329 = vld [vmem:[#allocation4 + $0x6f0] sm:$0xff]
    %v330 = vld [vmem:[#allocation4 + $0x6f8] sm:$0xff]
    %v331 = vld [vmem:[#allocation4 + $0x700] sm:$0xff]
    %v332 = vld [vmem:[#allocation4 + $0x708] sm:$0xff]
    %v333 = vld [vmem:[#allocation4 + $0x710] sm:$0xff]
    %v334 = vld [vmem:[#allocation4 + $0x718] sm:$0xff]
    %v335 = vld [vmem:[#allocation4 + $0x720] sm:$0xff]
    %v336 = vld [vmem:[#allocation4 + $0x728] sm:$0xff]
    %v337 = vld [vmem:[#allocation4 + $0x730] sm:$0xff]
    %v338 = vld [vmem:[#allocation4 + $0x738] sm:$0xff]
    %v339 = vld [vmem:[#allocation4 + $0x740] sm:$0xff]
    %v340 = vld [vmem:[#allocation4 + $0x748] sm:$0xff]
    %v341 = vld [vmem:[#allocation4 + $0x750] sm:$0xff]
    %v342 = vld [vmem:[#allocation4 + $0x758] sm:$0xff]
    %v343 = vld [vmem:[#allocation4 + $0x760] sm:$0xff]
    %v344 = vld [vmem:[#allocation4 + $0x768] sm:$0xff]
    %v345 = vld [vmem:[#allocation4 + $0x770] sm:$0xff]
    %v346 = vld [vmem:[#allocation4 + $0x778] sm:$0xff]
    %v347 = vld [vmem:[#allocation4 + $0x780] sm:$0xff]
    %v348 = vld [vmem:[#allocation4 + $0x788] sm:$0xff]
    %v349 = vld [vmem:[#allocation4 + $0x790] sm:$0xff]
    %v350 = vld [vmem:[#allocation4 + $0x798] sm:$0xff]
    %v351 = vld [vmem:[#allocation4 + $0x7a0] sm:$0xff]
    %v352 = vld [vmem:[#allocation4 + $0x7a8] sm:$0xff]
    %v353 = vld [vmem:[#allocation4 + $0x7b0] sm:$0xff]
    %v354 = vld [vmem:[#allocation4 + $0x7b8] sm:$0xff]
    %v355 = vld [vmem:[#allocation4 + $0x7c0] sm:$0xff]
    %v356 = vld [vmem:[#allocation4 + $0x7c8] sm:$0xff]
    %v357 = vld [vmem:[#allocation4 + $0x7d0] sm:$0xff]
    %v358 = vld [vmem:[#allocation4 + $0x7d8] sm:$0xff]
    %v359 = vld [vmem:[#allocation4 + $0x7e0] sm:$0xff]
    %v360 = vld [vmem:[#allocation4 + $0x7e8] sm:$0xff]
    %v361 = vld [vmem:[#allocation4 + $0x7f0] sm:$0xff]
    %v362 = vld [vmem:[#allocation4 + $0x7f8] sm:$0xff]
    %v363 = vld [vmem:[#allocation6] sm:$0xf]
    %v365 = vlaneseq
    %v366 = vshrl.u32 %v365, 7
    %v367 = vsub.s32 0, %v366
    %v368 = vrot.slane %v363, %v367
    %v369 = vlaneseq
    %v370 = vshrl.u32 %v369, 7
    %v371 = vsub.s32 1, %v370
    %v372 = vrot.slane %v363, %v371
    %v373 = vlaneseq
    %v374 = vshrl.u32 %v373, 7
    %v375 = vsub.s32 2, %v374
    %v376 = vrot.slane %v363, %v375
    %v377 = vlaneseq
    %v378 = vshrl.u32 %v377, 7
    %v379 = vsub.s32 3, %v378
    %v380 = vrot.slane %v363, %v379
    %v641 = vunpack.c.l.b16 %v107
    %v642 = vunpack.c.h.b16 %v107
    %v643 = vunpack.c.l.b16 %v108
    %v644 = vunpack.c.h.b16 %v108
    %v645 = vunpack.c.l.b16 %v109
    %v646 = vunpack.c.h.b16 %v109
    %v647 = vunpack.c.l.b16 %v110
    %v648 = vunpack.c.h.b16 %v110
    %v649 = vunpack.c.l.b16 %v111
    %v650 = vunpack.c.h.b16 %v111
    %v651 = vunpack.c.l.b16 %v112
    %v652 = vunpack.c.h.b16 %v112
    %v653 = vunpack.c.l.b16 %v113
    %v654 = vunpack.c.h.b16 %v113
    %v655 = vunpack.c.l.b16 %v114
    %v656 = vunpack.c.h.b16 %v114
    %v657 = vunpack.c.l.b16 %v115
    %v658 = vunpack.c.h.b16 %v115
    %v659 = vunpack.c.l.b16 %v116
    %v660 = vunpack.c.h.b16 %v116
    %v661 = vunpack.c.l.b16 %v117
    %v662 = vunpack.c.h.b16 %v117
    %v663 = vunpack.c.l.b16 %v118
    %v664 = vunpack.c.h.b16 %v118
    %v665 = vunpack.c.l.b16 %v119
    %v666 = vunpack.c.h.b16 %v119
    %v667 = vunpack.c.l.b16 %v120
    %v668 = vunpack.c.h.b16 %v120
    %v669 = vunpack.c.l.b16 %v121
    %v670 = vunpack.c.h.b16 %v121
    %v671 = vunpack.c.l.b16 %v122
    %v672 = vunpack.c.h.b16 %v122
    %v673 = vunpack.c.l.b16 %v123
    %v674 = vunpack.c.h.b16 %v123
    %v675 = vunpack.c.l.b16 %v124
    %v676 = vunpack.c.h.b16 %v124
    %v677 = vunpack.c.l.b16 %v125
    %v678 = vunpack.c.h.b16 %v125
    %v679 = vunpack.c.l.b16 %v126
    %v680 = vunpack.c.h.b16 %v126
    %v681 = vunpack.c.l.b16 %v127
    %v682 = vunpack.c.h.b16 %v127
    %v683 = vunpack.c.l.b16 %v128
    %v684 = vunpack.c.h.b16 %v128
    %v685 = vunpack.c.l.b16 %v129
    %v686 = vunpack.c.h.b16 %v129
    %v687 = vunpack.c.l.b16 %v130
    %v688 = vunpack.c.h.b16 %v130
    %v689 = vunpack.c.l.b16 %v131
    %v690 = vunpack.c.h.b16 %v131
    %v691 = vunpack.c.l.b16 %v132
    %v692 = vunpack.c.h.b16 %v132
    %v693 = vunpack.c.l.b16 %v133
    %v694 = vunpack.c.h.b16 %v133
    %v695 = vunpack.c.l.b16 %v134
    %v696 = vunpack.c.h.b16 %v134
    %v697 = vunpack.c.l.b16 %v135
    %v698 = vunpack.c.h.b16 %v135
    %v699 = vunpack.c.l.b16 %v136
    %v700 = vunpack.c.h.b16 %v136
    %v701 = vunpack.c.l.b16 %v137
    %v702 = vunpack.c.h.b16 %v137
    %v703 = vunpack.c.l.b16 %v138
    %v704 = vunpack.c.h.b16 %v138
    %v705 = vunpack.c.l.b16 %v139
    %v706 = vunpack.c.h.b16 %v139
    %v707 = vunpack.c.l.b16 %v140
    %v708 = vunpack.c.h.b16 %v140
    %v709 = vunpack.c.l.b16 %v141
    %v710 = vunpack.c.h.b16 %v141
    %v711 = vunpack.c.l.b16 %v142
    %v712 = vunpack.c.h.b16 %v142
    %v713 = vunpack.c.l.b16 %v143
    %v714 = vunpack.c.h.b16 %v143
    %v715 = vunpack.c.l.b16 %v144
    %v716 = vunpack.c.h.b16 %v144
    %v717 = vunpack.c.l.b16 %v145
    %v718 = vunpack.c.h.b16 %v145
    %v719 = vunpack.c.l.b16 %v146
    %v720 = vunpack.c.h.b16 %v146
    %v721 = vunpack.c.l.b16 %v147
    %v722 = vunpack.c.h.b16 %v147
    %v723 = vunpack.c.l.b16 %v148
    %v724 = vunpack.c.h.b16 %v148
    %v725 = vunpack.c.l.b16 %v149
    %v726 = vunpack.c.h.b16 %v149
    %v727 = vunpack.c.l.b16 %v150
    %v728 = vunpack.c.h.b16 %v150
    %v729 = vunpack.c.l.b16 %v151
    %v730 = vunpack.c.h.b16 %v151
    %v731 = vunpack.c.l.b16 %v152
    %v732 = vunpack.c.h.b16 %v152
    %v733 = vunpack.c.l.b16 %v153
    %v734 = vunpack.c.h.b16 %v153
    %v735 = vunpack.c.l.b16 %v154
    %v736 = vunpack.c.h.b16 %v154
    %v737 = vunpack.c.l.b16 %v155
    %v738 = vunpack.c.h.b16 %v155
    %v739 = vunpack.c.l.b16 %v156
    %v740 = vunpack.c.h.b16 %v156
    %v741 = vunpack.c.l.b16 %v157
    %v742 = vunpack.c.h.b16 %v157
    %v743 = vunpack.c.l.b16 %v158
    %v744 = vunpack.c.h.b16 %v158
    %v745 = vunpack.c.l.b16 %v159
    %v746 = vunpack.c.h.b16 %v159
    %v747 = vunpack.c.l.b16 %v160
    %v748 = vunpack.c.h.b16 %v160
    %v749 = vunpack.c.l.b16 %v161
    %v750 = vunpack.c.h.b16 %v161
    %v751 = vunpack.c.l.b16 %v162
    %v752 = vunpack.c.h.b16 %v162
    %v753 = vunpack.c.l.b16 %v163
    %v754 = vunpack.c.h.b16 %v163
    %v755 = vunpack.c.l.b16 %v164
    %v756 = vunpack.c.h.b16 %v164
    %v757 = vunpack.c.l.b16 %v165
    %v758 = vunpack.c.h.b16 %v165
    %v759 = vunpack.c.l.b16 %v166
    %v760 = vunpack.c.h.b16 %v166
    %v761 = vunpack.c.l.b16 %v167
    %v762 = vunpack.c.h.b16 %v167
    %v763 = vunpack.c.l.b16 %v168
    %v764 = vunpack.c.h.b16 %v168
    %v765 = vunpack.c.l.b16 %v169
    %v766 = vunpack.c.h.b16 %v169
    %v767 = vunpack.c.l.b16 %v170
    %v768 = vunpack.c.h.b16 %v170
    %v769 = vunpack.c.l.b16 %v171
    %v770 = vunpack.c.h.b16 %v171
    %v771 = vunpack.c.l.b16 %v172
    %v772 = vunpack.c.h.b16 %v172
    %v773 = vunpack.c.l.b16 %v173
    %v774 = vunpack.c.h.b16 %v173
    %v775 = vunpack.c.l.b16 %v174
    %v776 = vunpack.c.h.b16 %v174
    %v777 = vunpack.c.l.b16 %v175
    %v778 = vunpack.c.h.b16 %v175
    %v779 = vunpack.c.l.b16 %v176
    %v780 = vunpack.c.h.b16 %v176
    %v781 = vunpack.c.l.b16 %v177
    %v782 = vunpack.c.h.b16 %v177
    %v783 = vunpack.c.l.b16 %v178
    %v784 = vunpack.c.h.b16 %v178
    %v785 = vunpack.c.l.b16 %v179
    %v786 = vunpack.c.h.b16 %v179
    %v787 = vunpack.c.l.b16 %v180
    %v788 = vunpack.c.h.b16 %v180
    %v789 = vunpack.c.l.b16 %v181
    %v790 = vunpack.c.h.b16 %v181
    %v791 = vunpack.c.l.b16 %v182
    %v792 = vunpack.c.h.b16 %v182
    %v793 = vunpack.c.l.b16 %v183
    %v794 = vunpack.c.h.b16 %v183
    %v795 = vunpack.c.l.b16 %v184
    %v796 = vunpack.c.h.b16 %v184
    %v797 = vunpack.c.l.b16 %v185
    %v798 = vunpack.c.h.b16 %v185
    %v799 = vunpack.c.l.b16 %v186
    %v800 = vunpack.c.h.b16 %v186
    %v801 = vunpack.c.l.b16 %v187
    %v802 = vunpack.c.h.b16 %v187
    %v803 = vunpack.c.l.b16 %v188
    %v804 = vunpack.c.h.b16 %v188
    %v805 = vunpack.c.l.b16 %v189
    %v806 = vunpack.c.h.b16 %v189
    %v807 = vunpack.c.l.b16 %v190
    %v808 = vunpack.c.h.b16 %v190
    %v809 = vunpack.c.l.b16 %v191
    %v810 = vunpack.c.h.b16 %v191
    %v811 = vunpack.c.l.b16 %v192
    %v812 = vunpack.c.h.b16 %v192
    %v813 = vunpack.c.l.b16 %v193
    %v814 = vunpack.c.h.b16 %v193
    %v815 = vunpack.c.l.b16 %v194
    %v816 = vunpack.c.h.b16 %v194
    %v817 = vunpack.c.l.b16 %v195
    %v818 = vunpack.c.h.b16 %v195
    %v819 = vunpack.c.l.b16 %v196
    %v820 = vunpack.c.h.b16 %v196
    %v821 = vunpack.c.l.b16 %v197
    %v822 = vunpack.c.h.b16 %v197
    %v823 = vunpack.c.l.b16 %v198
    %v824 = vunpack.c.h.b16 %v198
    %v825 = vunpack.c.l.b16 %v199
    %v826 = vunpack.c.h.b16 %v199
    %v827 = vunpack.c.l.b16 %v200
    %v828 = vunpack.c.h.b16 %v200
    %v829 = vunpack.c.l.b16 %v201
    %v830 = vunpack.c.h.b16 %v201
    %v831 = vunpack.c.l.b16 %v202
    %v832 = vunpack.c.h.b16 %v202
    %v833 = vunpack.c.l.b16 %v203
    %v834 = vunpack.c.h.b16 %v203
    %v835 = vunpack.c.l.b16 %v204
    %v836 = vunpack.c.h.b16 %v204
    %v837 = vunpack.c.l.b16 %v205
    %v838 = vunpack.c.h.b16 %v205
    %v839 = vunpack.c.l.b16 %v206
    %v840 = vunpack.c.h.b16 %v206
    %v841 = vunpack.c.l.b16 %v207
    %v842 = vunpack.c.h.b16 %v207
    %v843 = vunpack.c.l.b16 %v208
    %v844 = vunpack.c.h.b16 %v208
    %v845 = vunpack.c.l.b16 %v209
    %v846 = vunpack.c.h.b16 %v209
    %v847 = vunpack.c.l.b16 %v210
    %v848 = vunpack.c.h.b16 %v210
    %v849 = vunpack.c.l.b16 %v211
    %v850 = vunpack.c.h.b16 %v211
    %v851 = vunpack.c.l.b16 %v212
    %v852 = vunpack.c.h.b16 %v212
    %v853 = vunpack.c.l.b16 %v213
    %v854 = vunpack.c.h.b16 %v213
    %v855 = vunpack.c.l.b16 %v214
    %v856 = vunpack.c.h.b16 %v214
    %v857 = vunpack.c.l.b16 %v215
    %v858 = vunpack.c.h.b16 %v215
    %v859 = vunpack.c.l.b16 %v216
    %v860 = vunpack.c.h.b16 %v216
    %v861 = vunpack.c.l.b16 %v217
    %v862 = vunpack.c.h.b16 %v217
    %v863 = vunpack.c.l.b16 %v218
    %v864 = vunpack.c.h.b16 %v218
    %v865 = vunpack.c.l.b16 %v219
    %v866 = vunpack.c.h.b16 %v219
    %v867 = vunpack.c.l.b16 %v220
    %v868 = vunpack.c.h.b16 %v220
    %v869 = vunpack.c.l.b16 %v221
    %v870 = vunpack.c.h.b16 %v221
    %v871 = vunpack.c.l.b16 %v222
    %v872 = vunpack.c.h.b16 %v222
    %v873 = vunpack.c.l.b16 %v223
    %v874 = vunpack.c.h.b16 %v223
    %v875 = vunpack.c.l.b16 %v224
    %v876 = vunpack.c.h.b16 %v224
    %v877 = vunpack.c.l.b16 %v225
    %v878 = vunpack.c.h.b16 %v225
    %v879 = vunpack.c.l.b16 %v226
    %v880 = vunpack.c.h.b16 %v226
    %v881 = vunpack.c.l.b16 %v227
    %v882 = vunpack.c.h.b16 %v227
    %v883 = vunpack.c.l.b16 %v228
    %v884 = vunpack.c.h.b16 %v228
    %v885 = vunpack.c.l.b16 %v229
    %v886 = vunpack.c.h.b16 %v229
    %v887 = vunpack.c.l.b16 %v230
    %v888 = vunpack.c.h.b16 %v230
    %v889 = vunpack.c.l.b16 %v231
    %v890 = vunpack.c.h.b16 %v231
    %v891 = vunpack.c.l.b16 %v232
    %v892 = vunpack.c.h.b16 %v232
    %v893 = vunpack.c.l.b16 %v233
    %v894 = vunpack.c.h.b16 %v233
    %v895 = vunpack.c.l.b16 %v234
    %v896 = vunpack.c.h.b16 %v234
    %v897 = vunpack.c.l.b16 %v235
    %v898 = vunpack.c.h.b16 %v235
    %v899 = vunpack.c.l.b16 %v236
    %v900 = vunpack.c.h.b16 %v236
    %v901 = vunpack.c.l.b16 %v237
    %v902 = vunpack.c.h.b16 %v237
    %v903 = vunpack.c.l.b16 %v238
    %v904 = vunpack.c.h.b16 %v238
    %v905 = vunpack.c.l.b16 %v239
    %v906 = vunpack.c.h.b16 %v239
    %v907 = vunpack.c.l.b16 %v240
    %v908 = vunpack.c.h.b16 %v240
    %v909 = vunpack.c.l.b16 %v241
    %v910 = vunpack.c.h.b16 %v241
    %v911 = vunpack.c.l.b16 %v242
    %v912 = vunpack.c.h.b16 %v242
    %v913 = vunpack.c.l.b16 %v243
    %v914 = vunpack.c.h.b16 %v243
    %v915 = vunpack.c.l.b16 %v244
    %v916 = vunpack.c.h.b16 %v244
    %v917 = vunpack.c.l.b16 %v245
    %v918 = vunpack.c.h.b16 %v245
    %v919 = vunpack.c.l.b16 %v246
    %v920 = vunpack.c.h.b16 %v246
    %v921 = vunpack.c.l.b16 %v247
    %v922 = vunpack.c.h.b16 %v247
    %v923 = vunpack.c.l.b16 %v248
    %v924 = vunpack.c.h.b16 %v248
    %v925 = vunpack.c.l.b16 %v249
    %v926 = vunpack.c.h.b16 %v249
    %v927 = vunpack.c.l.b16 %v250
    %v928 = vunpack.c.h.b16 %v250
    %v929 = vunpack.c.l.b16 %v251
    %v930 = vunpack.c.h.b16 %v251
    %v931 = vunpack.c.l.b16 %v252
    %v932 = vunpack.c.h.b16 %v252
    %v933 = vunpack.c.l.b16 %v253
    %v934 = vunpack.c.h.b16 %v253
    %v935 = vunpack.c.l.b16 %v254
    %v936 = vunpack.c.h.b16 %v254
    %v937 = vunpack.c.l.b16 %v255
    %v938 = vunpack.c.h.b16 %v255
    %v939 = vunpack.c.l.b16 %v256
    %v940 = vunpack.c.h.b16 %v256
    %v941 = vunpack.c.l.b16 %v257
    %v942 = vunpack.c.h.b16 %v257
    %v943 = vunpack.c.l.b16 %v258
    %v944 = vunpack.c.h.b16 %v258
    %v945 = vunpack.c.l.b16 %v259
    %v946 = vunpack.c.h.b16 %v259
    %v947 = vunpack.c.l.b16 %v260
    %v948 = vunpack.c.h.b16 %v260
    %v949 = vunpack.c.l.b16 %v261
    %v950 = vunpack.c.h.b16 %v261
    %v951 = vunpack.c.l.b16 %v262
    %v952 = vunpack.c.h.b16 %v262
    %v953 = vunpack.c.l.b16 %v263
    %v954 = vunpack.c.h.b16 %v263
    %v955 = vunpack.c.l.b16 %v264
    %v956 = vunpack.c.h.b16 %v264
    %v957 = vunpack.c.l.b16 %v265
    %v958 = vunpack.c.h.b16 %v265
    %v959 = vunpack.c.l.b16 %v266
    %v960 = vunpack.c.h.b16 %v266
    %v961 = vunpack.c.l.b16 %v267
    %v962 = vunpack.c.h.b16 %v267
    %v963 = vunpack.c.l.b16 %v268
    %v964 = vunpack.c.h.b16 %v268
    %v965 = vunpack.c.l.b16 %v269
    %v966 = vunpack.c.h.b16 %v269
    %v967 = vunpack.c.l.b16 %v270
    %v968 = vunpack.c.h.b16 %v270
    %v969 = vunpack.c.l.b16 %v271
    %v970 = vunpack.c.h.b16 %v271
    %v971 = vunpack.c.l.b16 %v272
    %v972 = vunpack.c.h.b16 %v272
    %v973 = vunpack.c.l.b16 %v273
    %v974 = vunpack.c.h.b16 %v273
    %v975 = vunpack.c.l.b16 %v274
    %v976 = vunpack.c.h.b16 %v274
    %v977 = vunpack.c.l.b16 %v275
    %v978 = vunpack.c.h.b16 %v275
    %v979 = vunpack.c.l.b16 %v276
    %v980 = vunpack.c.h.b16 %v276
    %v981 = vunpack.c.l.b16 %v277
    %v982 = vunpack.c.h.b16 %v277
    %v983 = vunpack.c.l.b16 %v278
    %v984 = vunpack.c.h.b16 %v278
    %v985 = vunpack.c.l.b16 %v279
    %v986 = vunpack.c.h.b16 %v279
    %v987 = vunpack.c.l.b16 %v280
    %v988 = vunpack.c.h.b16 %v280
    %v989 = vunpack.c.l.b16 %v281
    %v990 = vunpack.c.h.b16 %v281
    %v991 = vunpack.c.l.b16 %v282
    %v992 = vunpack.c.h.b16 %v282
    %v993 = vunpack.c.l.b16 %v283
    %v994 = vunpack.c.h.b16 %v283
    %v995 = vunpack.c.l.b16 %v284
    %v996 = vunpack.c.h.b16 %v284
    %v997 = vunpack.c.l.b16 %v285
    %v998 = vunpack.c.h.b16 %v285
    %v999 = vunpack.c.l.b16 %v286
    %v1000 = vunpack.c.h.b16 %v286
    %v1001 = vunpack.c.l.b16 %v287
    %v1002 = vunpack.c.h.b16 %v287
    %v1003 = vunpack.c.l.b16 %v288
    %v1004 = vunpack.c.h.b16 %v288
    %v1005 = vunpack.c.l.b16 %v289
    %v1006 = vunpack.c.h.b16 %v289
    %v1007 = vunpack.c.l.b16 %v290
    %v1008 = vunpack.c.h.b16 %v290
    %v1009 = vunpack.c.l.b16 %v291
    %v1010 = vunpack.c.h.b16 %v291
    %v1011 = vunpack.c.l.b16 %v292
    %v1012 = vunpack.c.h.b16 %v292
    %v1013 = vunpack.c.l.b16 %v293
    %v1014 = vunpack.c.h.b16 %v293
    %v1015 = vunpack.c.l.b16 %v294
    %v1016 = vunpack.c.h.b16 %v294
    %v1017 = vunpack.c.l.b16 %v295
    %v1018 = vunpack.c.h.b16 %v295
    %v1019 = vunpack.c.l.b16 %v296
    %v1020 = vunpack.c.h.b16 %v296
    %v1021 = vunpack.c.l.b16 %v297
    %v1022 = vunpack.c.h.b16 %v297
    %v1023 = vunpack.c.l.b16 %v298
    %v1024 = vunpack.c.h.b16 %v298
    %v1025 = vunpack.c.l.b16 %v299
    %v1026 = vunpack.c.h.b16 %v299
    %v1027 = vunpack.c.l.b16 %v300
    %v1028 = vunpack.c.h.b16 %v300
    %v1029 = vunpack.c.l.b16 %v301
    %v1030 = vunpack.c.h.b16 %v301
    %v1031 = vunpack.c.l.b16 %v302
    %v1032 = vunpack.c.h.b16 %v302
    %v1033 = vunpack.c.l.b16 %v303
    %v1034 = vunpack.c.h.b16 %v303
    %v1035 = vunpack.c.l.b16 %v304
    %v1036 = vunpack.c.h.b16 %v304
    %v1037 = vunpack.c.l.b16 %v305
    %v1038 = vunpack.c.h.b16 %v305
    %v1039 = vunpack.c.l.b16 %v306
    %v1040 = vunpack.c.h.b16 %v306
    %v1041 = vunpack.c.l.b16 %v307
    %v1042 = vunpack.c.h.b16 %v307
    %v1043 = vunpack.c.l.b16 %v308
    %v1044 = vunpack.c.h.b16 %v308
    %v1045 = vunpack.c.l.b16 %v309
    %v1046 = vunpack.c.h.b16 %v309
    %v1047 = vunpack.c.l.b16 %v310
    %v1048 = vunpack.c.h.b16 %v310
    %v1049 = vunpack.c.l.b16 %v311
    %v1050 = vunpack.c.h.b16 %v311
    %v1051 = vunpack.c.l.b16 %v312
    %v1052 = vunpack.c.h.b16 %v312
    %v1053 = vunpack.c.l.b16 %v313
    %v1054 = vunpack.c.h.b16 %v313
    %v1055 = vunpack.c.l.b16 %v314
    %v1056 = vunpack.c.h.b16 %v314
    %v1057 = vunpack.c.l.b16 %v315
    %v1058 = vunpack.c.h.b16 %v315
    %v1059 = vunpack.c.l.b16 %v316
    %v1060 = vunpack.c.h.b16 %v316
    %v1061 = vunpack.c.l.b16 %v317
    %v1062 = vunpack.c.h.b16 %v317
    %v1063 = vunpack.c.l.b16 %v318
    %v1064 = vunpack.c.h.b16 %v318
    %v1065 = vunpack.c.l.b16 %v319
    %v1066 = vunpack.c.h.b16 %v319
    %v1067 = vunpack.c.l.b16 %v320
    %v1068 = vunpack.c.h.b16 %v320
    %v1069 = vunpack.c.l.b16 %v321
    %v1070 = vunpack.c.h.b16 %v321
    %v1071 = vunpack.c.l.b16 %v322
    %v1072 = vunpack.c.h.b16 %v322
    %v1073 = vunpack.c.l.b16 %v323
    %v1074 = vunpack.c.h.b16 %v323
    %v1075 = vunpack.c.l.b16 %v324
    %v1076 = vunpack.c.h.b16 %v324
    %v1077 = vunpack.c.l.b16 %v325
    %v1078 = vunpack.c.h.b16 %v325
    %v1079 = vunpack.c.l.b16 %v326
    %v1080 = vunpack.c.h.b16 %v326
    %v1081 = vunpack.c.l.b16 %v327
    %v1082 = vunpack.c.h.b16 %v327
    %v1083 = vunpack.c.l.b16 %v328
    %v1084 = vunpack.c.h.b16 %v328
    %v1085 = vunpack.c.l.b16 %v329
    %v1086 = vunpack.c.h.b16 %v329
    %v1087 = vunpack.c.l.b16 %v330
    %v1088 = vunpack.c.h.b16 %v330
    %v1089 = vunpack.c.l.b16 %v331
    %v1090 = vunpack.c.h.b16 %v331
    %v1091 = vunpack.c.l.b16 %v332
    %v1092 = vunpack.c.h.b16 %v332
    %v1093 = vunpack.c.l.b16 %v333
    %v1094 = vunpack.c.h.b16 %v333
    %v1095 = vunpack.c.l.b16 %v334
    %v1096 = vunpack.c.h.b16 %v334
    %v1097 = vunpack.c.l.b16 %v335
    %v1098 = vunpack.c.h.b16 %v335
    %v1099 = vunpack.c.l.b16 %v336
    %v1100 = vunpack.c.h.b16 %v336
    %v1101 = vunpack.c.l.b16 %v337
    %v1102 = vunpack.c.h.b16 %v337
    %v1103 = vunpack.c.l.b16 %v338
    %v1104 = vunpack.c.h.b16 %v338
    %v1105 = vunpack.c.l.b16 %v339
    %v1106 = vunpack.c.h.b16 %v339
    %v1107 = vunpack.c.l.b16 %v340
    %v1108 = vunpack.c.h.b16 %v340
    %v1109 = vunpack.c.l.b16 %v341
    %v1110 = vunpack.c.h.b16 %v341
    %v1111 = vunpack.c.l.b16 %v342
    %v1112 = vunpack.c.h.b16 %v342
    %v1113 = vunpack.c.l.b16 %v343
    %v1114 = vunpack.c.h.b16 %v343
    %v1115 = vunpack.c.l.b16 %v344
    %v1116 = vunpack.c.h.b16 %v344
    %v1117 = vunpack.c.l.b16 %v345
    %v1118 = vunpack.c.h.b16 %v345
    %v1119 = vunpack.c.l.b16 %v346
    %v1120 = vunpack.c.h.b16 %v346
    %v1121 = vunpack.c.l.b16 %v347
    %v1122 = vunpack.c.h.b16 %v347
    %v1123 = vunpack.c.l.b16 %v348
    %v1124 = vunpack.c.h.b16 %v348
    %v1125 = vunpack.c.l.b16 %v349
    %v1126 = vunpack.c.h.b16 %v349
    %v1127 = vunpack.c.l.b16 %v350
    %v1128 = vunpack.c.h.b16 %v350
    %v1129 = vunpack.c.l.b16 %v351
    %v1130 = vunpack.c.h.b16 %v351
    %v1131 = vunpack.c.l.b16 %v352
    %v1132 = vunpack.c.h.b16 %v352
    %v1133 = vunpack.c.l.b16 %v353
    %v1134 = vunpack.c.h.b16 %v353
    %v1135 = vunpack.c.l.b16 %v354
    %v1136 = vunpack.c.h.b16 %v354
    %v1137 = vunpack.c.l.b16 %v355
    %v1138 = vunpack.c.h.b16 %v355
    %v1139 = vunpack.c.l.b16 %v356
    %v1140 = vunpack.c.h.b16 %v356
    %v1141 = vunpack.c.l.b16 %v357
    %v1142 = vunpack.c.h.b16 %v357
    %v1143 = vunpack.c.l.b16 %v358
    %v1144 = vunpack.c.h.b16 %v358
    %v1145 = vunpack.c.l.b16 %v359
    %v1146 = vunpack.c.h.b16 %v359
    %v1147 = vunpack.c.l.b16 %v360
    %v1148 = vunpack.c.h.b16 %v360
    %v1149 = vunpack.c.l.b16 %v361
    %v1150 = vunpack.c.h.b16 %v361
    %v1151 = vunpack.c.l.b16 %v362
    %v1152 = vunpack.c.h.b16 %v362
    %v1153 = vpack.c.b16 %v645, %v641
    %v1154 = vpack.c.b16 %v646, %v642
    %v1155 = vpack.c.b16 %v647, %v643
    %v1156 = vpack.c.b16 %v648, %v644
    %v1157 = vpack.c.b16 %v653, %v649
    %v1158 = vpack.c.b16 %v654, %v650
    %v1159 = vpack.c.b16 %v655, %v651
    %v1160 = vpack.c.b16 %v656, %v652
    %v1161 = vpack.c.b16 %v661, %v657
    %v1162 = vpack.c.b16 %v662, %v658
    %v1163 = vpack.c.b16 %v663, %v659
    %v1164 = vpack.c.b16 %v664, %v660
    %v1165 = vpack.c.b16 %v669, %v665
    %v1166 = vpack.c.b16 %v670, %v666
    %v1167 = vpack.c.b16 %v671, %v667
    %v1168 = vpack.c.b16 %v672, %v668
    %v1169 = vpack.c.b16 %v677, %v673
    %v1170 = vpack.c.b16 %v678, %v674
    %v1171 = vpack.c.b16 %v679, %v675
    %v1172 = vpack.c.b16 %v680, %v676
    %v1173 = vpack.c.b16 %v685, %v681
    %v1174 = vpack.c.b16 %v686, %v682
    %v1175 = vpack.c.b16 %v687, %v683
    %v1176 = vpack.c.b16 %v688, %v684
    %v1177 = vpack.c.b16 %v693, %v689
    %v1178 = vpack.c.b16 %v694, %v690
    %v1179 = vpack.c.b16 %v695, %v691
    %v1180 = vpack.c.b16 %v696, %v692
    %v1181 = vpack.c.b16 %v701, %v697
    %v1182 = vpack.c.b16 %v702, %v698
    %v1183 = vpack.c.b16 %v703, %v699
    %v1184 = vpack.c.b16 %v704, %v700
    %v1185 = vpack.c.b16 %v709, %v705
    %v1186 = vpack.c.b16 %v710, %v706
    %v1187 = vpack.c.b16 %v711, %v707
    %v1188 = vpack.c.b16 %v712, %v708
    %v1189 = vpack.c.b16 %v717, %v713
    %v1190 = vpack.c.b16 %v718, %v714
    %v1191 = vpack.c.b16 %v719, %v715
    %v1192 = vpack.c.b16 %v720, %v716
    %v1193 = vpack.c.b16 %v725, %v721
    %v1194 = vpack.c.b16 %v726, %v722
    %v1195 = vpack.c.b16 %v727, %v723
    %v1196 = vpack.c.b16 %v728, %v724
    %v1197 = vpack.c.b16 %v733, %v729
    %v1198 = vpack.c.b16 %v734, %v730
    %v1199 = vpack.c.b16 %v735, %v731
    %v1200 = vpack.c.b16 %v736, %v732
    %v1201 = vpack.c.b16 %v741, %v737
    %v1202 = vpack.c.b16 %v742, %v738
    %v1203 = vpack.c.b16 %v743, %v739
    %v1204 = vpack.c.b16 %v744, %v740
    %v1205 = vpack.c.b16 %v749, %v745
    %v1206 = vpack.c.b16 %v750, %v746
    %v1207 = vpack.c.b16 %v751, %v747
    %v1208 = vpack.c.b16 %v752, %v748
    %v1209 = vpack.c.b16 %v757, %v753
    %v1210 = vpack.c.b16 %v758, %v754
    %v1211 = vpack.c.b16 %v759, %v755
    %v1212 = vpack.c.b16 %v760, %v756
    %v1213 = vpack.c.b16 %v765, %v761
    %v1214 = vpack.c.b16 %v766, %v762
    %v1215 = vpack.c.b16 %v767, %v763
    %v1216 = vpack.c.b16 %v768, %v764
    %v1217 = vpack.c.b16 %v773, %v769
    %v1218 = vpack.c.b16 %v774, %v770
    %v1219 = vpack.c.b16 %v775, %v771
    %v1220 = vpack.c.b16 %v776, %v772
    %v1221 = vpack.c.b16 %v781, %v777
    %v1222 = vpack.c.b16 %v782, %v778
    %v1223 = vpack.c.b16 %v783, %v779
    %v1224 = vpack.c.b16 %v784, %v780
    %v1225 = vpack.c.b16 %v789, %v785
    %v1226 = vpack.c.b16 %v790, %v786
    %v1227 = vpack.c.b16 %v791, %v787
    %v1228 = vpack.c.b16 %v792, %v788
    %v1229 = vpack.c.b16 %v797, %v793
    %v1230 = vpack.c.b16 %v798, %v794
    %v1231 = vpack.c.b16 %v799, %v795
    %v1232 = vpack.c.b16 %v800, %v796
    %v1233 = vpack.c.b16 %v805, %v801
    %v1234 = vpack.c.b16 %v806, %v802
    %v1235 = vpack.c.b16 %v807, %v803
    %v1236 = vpack.c.b16 %v808, %v804
    %v1237 = vpack.c.b16 %v813, %v809
    %v1238 = vpack.c.b16 %v814, %v810
    %v1239 = vpack.c.b16 %v815, %v811
    %v1240 = vpack.c.b16 %v816, %v812
    %v1241 = vpack.c.b16 %v821, %v817
    %v1242 = vpack.c.b16 %v822, %v818
    %v1243 = vpack.c.b16 %v823, %v819
    %v1244 = vpack.c.b16 %v824, %v820
    %v1245 = vpack.c.b16 %v829, %v825
    %v1246 = vpack.c.b16 %v830, %v826
    %v1247 = vpack.c.b16 %v831, %v827
    %v1248 = vpack.c.b16 %v832, %v828
    %v1249 = vpack.c.b16 %v837, %v833
    %v1250 = vpack.c.b16 %v838, %v834
    %v1251 = vpack.c.b16 %v839, %v835
    %v1252 = vpack.c.b16 %v840, %v836
    %v1253 = vpack.c.b16 %v845, %v841
    %v1254 = vpack.c.b16 %v846, %v842
    %v1255 = vpack.c.b16 %v847, %v843
    %v1256 = vpack.c.b16 %v848, %v844
    %v1257 = vpack.c.b16 %v853, %v849
    %v1258 = vpack.c.b16 %v854, %v850
    %v1259 = vpack.c.b16 %v855, %v851
    %v1260 = vpack.c.b16 %v856, %v852
    %v1261 = vpack.c.b16 %v861, %v857
    %v1262 = vpack.c.b16 %v862, %v858
    %v1263 = vpack.c.b16 %v863, %v859
    %v1264 = vpack.c.b16 %v864, %v860
    %v1265 = vpack.c.b16 %v869, %v865
    %v1266 = vpack.c.b16 %v870, %v866
    %v1267 = vpack.c.b16 %v871, %v867
    %v1268 = vpack.c.b16 %v872, %v868
    %v1269 = vpack.c.b16 %v877, %v873
    %v1270 = vpack.c.b16 %v878, %v874
    %v1271 = vpack.c.b16 %v879, %v875
    %v1272 = vpack.c.b16 %v880, %v876
    %v1273 = vpack.c.b16 %v885, %v881
    %v1274 = vpack.c.b16 %v886, %v882
    %v1275 = vpack.c.b16 %v887, %v883
    %v1276 = vpack.c.b16 %v888, %v884
    %v1277 = vpack.c.b16 %v893, %v889
    %v1278 = vpack.c.b16 %v894, %v890
    %v1279 = vpack.c.b16 %v895, %v891
    %v1280 = vpack.c.b16 %v896, %v892
    %v1281 = vpack.c.b16 %v901, %v897
    %v1282 = vpack.c.b16 %v902, %v898
    %v1283 = vpack.c.b16 %v903, %v899
    %v1284 = vpack.c.b16 %v904, %v900
    %v1285 = vpack.c.b16 %v909, %v905
    %v1286 = vpack.c.b16 %v910, %v906
    %v1287 = vpack.c.b16 %v911, %v907
    %v1288 = vpack.c.b16 %v912, %v908
    %v1289 = vpack.c.b16 %v917, %v913
    %v1290 = vpack.c.b16 %v918, %v914
    %v1291 = vpack.c.b16 %v919, %v915
    %v1292 = vpack.c.b16 %v920, %v916
    %v1293 = vpack.c.b16 %v925, %v921
    %v1294 = vpack.c.b16 %v926, %v922
    %v1295 = vpack.c.b16 %v927, %v923
    %v1296 = vpack.c.b16 %v928, %v924
    %v1297 = vpack.c.b16 %v933, %v929
    %v1298 = vpack.c.b16 %v934, %v930
    %v1299 = vpack.c.b16 %v935, %v931
    %v1300 = vpack.c.b16 %v936, %v932
    %v1301 = vpack.c.b16 %v941, %v937
    %v1302 = vpack.c.b16 %v942, %v938
    %v1303 = vpack.c.b16 %v943, %v939
    %v1304 = vpack.c.b16 %v944, %v940
    %v1305 = vpack.c.b16 %v949, %v945
    %v1306 = vpack.c.b16 %v950, %v946
    %v1307 = vpack.c.b16 %v951, %v947
    %v1308 = vpack.c.b16 %v952, %v948
    %v1309 = vpack.c.b16 %v957, %v953
    %v1310 = vpack.c.b16 %v958, %v954
    %v1311 = vpack.c.b16 %v959, %v955
    %v1312 = vpack.c.b16 %v960, %v956
    %v1313 = vpack.c.b16 %v965, %v961
    %v1314 = vpack.c.b16 %v966, %v962
    %v1315 = vpack.c.b16 %v967, %v963
    %v1316 = vpack.c.b16 %v968, %v964
    %v1317 = vpack.c.b16 %v973, %v969
    %v1318 = vpack.c.b16 %v974, %v970
    %v1319 = vpack.c.b16 %v975, %v971
    %v1320 = vpack.c.b16 %v976, %v972
    %v1321 = vpack.c.b16 %v981, %v977
    %v1322 = vpack.c.b16 %v982, %v978
    %v1323 = vpack.c.b16 %v983, %v979
    %v1324 = vpack.c.b16 %v984, %v980
    %v1325 = vpack.c.b16 %v989, %v985
    %v1326 = vpack.c.b16 %v990, %v986
    %v1327 = vpack.c.b16 %v991, %v987
    %v1328 = vpack.c.b16 %v992, %v988
    %v1329 = vpack.c.b16 %v997, %v993
    %v1330 = vpack.c.b16 %v998, %v994
    %v1331 = vpack.c.b16 %v999, %v995
    %v1332 = vpack.c.b16 %v1000, %v996
    %v1333 = vpack.c.b16 %v1005, %v1001
    %v1334 = vpack.c.b16 %v1006, %v1002
    %v1335 = vpack.c.b16 %v1007, %v1003
    %v1336 = vpack.c.b16 %v1008, %v1004
    %v1337 = vpack.c.b16 %v1013, %v1009
    %v1338 = vpack.c.b16 %v1014, %v1010
    %v1339 = vpack.c.b16 %v1015, %v1011
    %v1340 = vpack.c.b16 %v1016, %v1012
    %v1341 = vpack.c.b16 %v1021, %v1017
    %v1342 = vpack.c.b16 %v1022, %v1018
    %v1343 = vpack.c.b16 %v1023, %v1019
    %v1344 = vpack.c.b16 %v1024, %v1020
    %v1345 = vpack.c.b16 %v1029, %v1025
    %v1346 = vpack.c.b16 %v1030, %v1026
    %v1347 = vpack.c.b16 %v1031, %v1027
    %v1348 = vpack.c.b16 %v1032, %v1028
    %v1349 = vpack.c.b16 %v1037, %v1033
    %v1350 = vpack.c.b16 %v1038, %v1034
    %v1351 = vpack.c.b16 %v1039, %v1035
    %v1352 = vpack.c.b16 %v1040, %v1036
    %v1353 = vpack.c.b16 %v1045, %v1041
    %v1354 = vpack.c.b16 %v1046, %v1042
    %v1355 = vpack.c.b16 %v1047, %v1043
    %v1356 = vpack.c.b16 %v1048, %v1044
    %v1357 = vpack.c.b16 %v1053, %v1049
    %v1358 = vpack.c.b16 %v1054, %v1050
    %v1359 = vpack.c.b16 %v1055, %v1051
    %v1360 = vpack.c.b16 %v1056, %v1052
    %v1361 = vpack.c.b16 %v1061, %v1057
    %v1362 = vpack.c.b16 %v1062, %v1058
    %v1363 = vpack.c.b16 %v1063, %v1059
    %v1364 = vpack.c.b16 %v1064, %v1060
    %v1365 = vpack.c.b16 %v1069, %v1065
    %v1366 = vpack.c.b16 %v1070, %v1066
    %v1367 = vpack.c.b16 %v1071, %v1067
    %v1368 = vpack.c.b16 %v1072, %v1068
    %v1369 = vpack.c.b16 %v1077, %v1073
    %v1370 = vpack.c.b16 %v1078, %v1074
    %v1371 = vpack.c.b16 %v1079, %v1075
    %v1372 = vpack.c.b16 %v1080, %v1076
    %v1373 = vpack.c.b16 %v1085, %v1081
    %v1374 = vpack.c.b16 %v1086, %v1082
    %v1375 = vpack.c.b16 %v1087, %v1083
    %v1376 = vpack.c.b16 %v1088, %v1084
    %v1377 = vpack.c.b16 %v1093, %v1089
    %v1378 = vpack.c.b16 %v1094, %v1090
    %v1379 = vpack.c.b16 %v1095, %v1091
    %v1380 = vpack.c.b16 %v1096, %v1092
    %v1381 = vpack.c.b16 %v1101, %v1097
    %v1382 = vpack.c.b16 %v1102, %v1098
    %v1383 = vpack.c.b16 %v1103, %v1099
    %v1384 = vpack.c.b16 %v1104, %v1100
    %v1385 = vpack.c.b16 %v1109, %v1105
    %v1386 = vpack.c.b16 %v1110, %v1106
    %v1387 = vpack.c.b16 %v1111, %v1107
    %v1388 = vpack.c.b16 %v1112, %v1108
    %v1389 = vpack.c.b16 %v1117, %v1113
    %v1390 = vpack.c.b16 %v1118, %v1114
    %v1391 = vpack.c.b16 %v1119, %v1115
    %v1392 = vpack.c.b16 %v1120, %v1116
    %v1393 = vpack.c.b16 %v1125, %v1121
    %v1394 = vpack.c.b16 %v1126, %v1122
    %v1395 = vpack.c.b16 %v1127, %v1123
    %v1396 = vpack.c.b16 %v1128, %v1124
    %v1397 = vpack.c.b16 %v1133, %v1129
    %v1398 = vpack.c.b16 %v1134, %v1130
    %v1399 = vpack.c.b16 %v1135, %v1131
    %v1400 = vpack.c.b16 %v1136, %v1132
    %v1401 = vpack.c.b16 %v1141, %v1137
    %v1402 = vpack.c.b16 %v1142, %v1138
    %v1403 = vpack.c.b16 %v1143, %v1139
    %v1404 = vpack.c.b16 %v1144, %v1140
    %v1405 = vpack.c.b16 %v1149, %v1145
    %v1406 = vpack.c.b16 %v1150, %v1146
    %v1407 = vpack.c.b16 %v1151, %v1147
    %v1408 = vpack.c.b16 %v1152, %v1148
    %1665 = vmatprep.subr.bf16.mxu0 %v1182
    %1666 = vmatpush1.bf16.msra.mxu0 %v1181
    %1667 = vmatprep.subr.bf16.mxu0 %v1178
    %1668 = vmatpush1.bf16.msra.mxu0 %v1177
    %1669 = vmatprep.subr.bf16.mxu0 %v1174
    %1670 = vmatpush1.bf16.msra.mxu0 %v1173
    %1671 = vmatprep.subr.bf16.mxu0 %v1170
    %1672 = vmatpush1.bf16.msra.mxu0 %v1169
    %1673 = vmatprep.subr.bf16.mxu0 %v1166
    %1674 = vmatpush1.bf16.msra.mxu0 %v1165
    %1675 = vmatprep.subr.bf16.mxu0 %v1162
    %1676 = vmatpush1.bf16.msra.mxu0 %v1161
    %1677 = vmatprep.subr.bf16.mxu0 %v1158
    %1678 = vmatpush1.bf16.msra.mxu0 %v1157
    %1679 = vmatprep.subr.bf16.mxu0 %v1154
    %1680 = vmatpush1.bf16.msra.mxu0 %v1153
    %1681 = vmatprep.subr.bf16.mxu0 %v1214
    %1682 = vmatpush2.bf16.msra.mxu0 %v1213
    %1683 = vmatprep.subr.bf16.mxu0 %v1210
    %1684 = vmatpush2.bf16.msra.mxu0 %v1209
    %1685 = vmatprep.subr.bf16.mxu0 %v1206
    %1686 = vmatpush2.bf16.msra.mxu0 %v1205
    %1687 = vmatprep.subr.bf16.mxu0 %v1202
    %1688 = vmatpush2.bf16.msra.mxu0 %v1201
    %1689 = vmatprep.subr.bf16.mxu0 %v1198
    %1690 = vmatpush2.bf16.msra.mxu0 %v1197
    %1691 = vmatprep.subr.bf16.mxu0 %v1194
    %1692 = vmatpush2.bf16.msra.mxu0 %v1193
    %1693 = vmatprep.subr.bf16.mxu0 %v1190
    %1694 = vmatpush2.bf16.msra.mxu0 %v1189
    %1695 = vmatprep.subr.bf16.mxu0 %v1186
    %1696 = vmatpush2.bf16.msra.mxu0 %v1185
    %1697 = vmatprep.mubr.bf16.mxu0 %v100
    %1698 = vmatmul.mubr.bf16.gmra.mxu0 %v99
    %v1699 = vpop.f32.mrf.mxu0
    %v1700 = vadd.f32 %v368, %v1699
    %v1701 = vpop.f32.mrf.mxu0
    %v1702 = vadd.f32 %v372, %v1701
    %v1703 = vpop.f32.mrf.mxu0
    %v1704 = vpop.f32.mrf.mxu0
    %1705 = vdwg.mxu0
    %1706 = vmatprep.subr.bf16.mxu0 %v1246
    %1707 = vmatpush1.bf16.msra.mxu0 %v1245
    %1708 = vmatprep.subr.bf16.mxu0 %v1242
    %1709 = vmatpush1.bf16.msra.mxu0 %v1241
    %1710 = vmatprep.subr.bf16.mxu0 %v1238
    %1711 = vmatpush1.bf16.msra.mxu0 %v1237
    %1712 = vmatprep.subr.bf16.mxu0 %v1234
    %1713 = vmatpush1.bf16.msra.mxu0 %v1233
    %1714 = vmatprep.subr.bf16.mxu0 %v1230
    %1715 = vmatpush1.bf16.msra.mxu0 %v1229
    %1716 = vmatprep.subr.bf16.mxu0 %v1226
    %1717 = vmatpush1.bf16.msra.mxu0 %v1225
    %1718 = vmatprep.subr.bf16.mxu0 %v1222
    %1719 = vmatpush1.bf16.msra.mxu0 %v1221
    %1720 = vmatprep.subr.bf16.mxu0 %v1218
    %1721 = vmatpush1.bf16.msra.mxu0 %v1217
    %1722 = vmatprep.subr.bf16.mxu0 %v1278
    %1723 = vmatpush2.bf16.msra.mxu0 %v1277
    %1724 = vmatprep.subr.bf16.mxu0 %v1274
    %1725 = vmatpush2.bf16.msra.mxu0 %v1273
    %1726 = vmatprep.subr.bf16.mxu0 %v1270
    %1727 = vmatpush2.bf16.msra.mxu0 %v1269
    %1728 = vmatprep.subr.bf16.mxu0 %v1266
    %1729 = vmatpush2.bf16.msra.mxu0 %v1265
    %1730 = vmatprep.subr.bf16.mxu0 %v1262
    %1731 = vmatpush2.bf16.msra.mxu0 %v1261
    %1732 = vmatprep.subr.bf16.mxu0 %v1258
    %1733 = vmatpush2.bf16.msra.mxu0 %v1257
    %1734 = vmatprep.subr.bf16.mxu0 %v1254
    %1735 = vmatpush2.bf16.msra.mxu0 %v1253
    %1736 = vmatprep.subr.bf16.mxu0 %v1250
    %1737 = vmatpush2.bf16.msra.mxu0 %v1249
    %1738 = vmatprep.mubr.bf16.mxu0 %v102
    %1739 = vmatmul.mubr.bf16.gmra.mxu0 %v101
    %v1740 = vpop.f32.mrf.mxu0
    %v1741 = vadd.f32 %v1700, %v1740
    %v1742 = vpop.f32.mrf.mxu0
    %v1743 = vadd.f32 %v1702, %v1742
    %v1744 = vpop.f32.mrf.mxu0
    %v1745 = vpop.f32.mrf.mxu0
    %1746 = vdwg.mxu0
    %1747 = vmatprep.subr.bf16.mxu0 %v1310
    %1748 = vmatpush1.bf16.msra.mxu0 %v1309
    %1749 = vmatprep.subr.bf16.mxu0 %v1306
    %1750 = vmatpush1.bf16.msra.mxu0 %v1305
    %1751 = vmatprep.subr.bf16.mxu0 %v1302
    %1752 = vmatpush1.bf16.msra.mxu0 %v1301
    %1753 = vmatprep.subr.bf16.mxu0 %v1298
    %1754 = vmatpush1.bf16.msra.mxu0 %v1297
    %1755 = vmatprep.subr.bf16.mxu0 %v1294
    %1756 = vmatpush1.bf16.msra.mxu0 %v1293
    %1757 = vmatprep.subr.bf16.mxu0 %v1290
    %1758 = vmatpush1.bf16.msra.mxu0 %v1289
    %1759 = vmatprep.subr.bf16.mxu0 %v1286
    %1760 = vmatpush1.bf16.msra.mxu0 %v1285
    %1761 = vmatprep.subr.bf16.mxu0 %v1282
    %1762 = vmatpush1.bf16.msra.mxu0 %v1281
    %1763 = vmatprep.subr.bf16.mxu0 %v1342
    %1764 = vmatpush2.bf16.msra.mxu0 %v1341
    %1765 = vmatprep.subr.bf16.mxu0 %v1338
    %1766 = vmatpush2.bf16.msra.mxu0 %v1337
    %1767 = vmatprep.subr.bf16.mxu0 %v1334
    %1768 = vmatpush2.bf16.msra.mxu0 %v1333
    %1769 = vmatprep.subr.bf16.mxu0 %v1330
    %1770 = vmatpush2.bf16.msra.mxu0 %v1329
    %1771 = vmatprep.subr.bf16.mxu0 %v1326
    %1772 = vmatpush2.bf16.msra.mxu0 %v1325
    %1773 = vmatprep.subr.bf16.mxu0 %v1322
    %1774 = vmatpush2.bf16.msra.mxu0 %v1321
    %1775 = vmatprep.subr.bf16.mxu0 %v1318
    %1776 = vmatpush2.bf16.msra.mxu0 %v1317
    %1777 = vmatprep.subr.bf16.mxu0 %v1314
    %1778 = vmatpush2.bf16.msra.mxu0 %v1313
    %1779 = vmatprep.mubr.bf16.mxu0 %v104
    %1780 = vmatmul.mubr.bf16.gmra.mxu0 %v103
    %v1781 = vpop.f32.mrf.mxu0
    %v1782 = vadd.f32 %v1741, %v1781
    %v1783 = vpop.f32.mrf.mxu0
    %v1784 = vadd.f32 %v1743, %v1783
    %v1785 = vpop.f32.mrf.mxu0
    %v1786 = vpop.f32.mrf.mxu0
    %1787 = vdwg.mxu0
    %1788 = vmatprep.subr.bf16.mxu0 %v1374
    %1789 = vmatpush1.bf16.msra.mxu0 %v1373
    %1790 = vmatprep.subr.bf16.mxu0 %v1370
    %1791 = vmatpush1.bf16.msra.mxu0 %v1369
    %1792 = vmatprep.subr.bf16.mxu0 %v1366
    %1793 = vmatpush1.bf16.msra.mxu0 %v1365
    %1794 = vmatprep.subr.bf16.mxu0 %v1362
    %1795 = vmatpush1.bf16.msra.mxu0 %v1361
    %1796 = vmatprep.subr.bf16.mxu0 %v1358
    %1797 = vmatpush1.bf16.msra.mxu0 %v1357
    %1798 = vmatprep.subr.bf16.mxu0 %v1354
    %1799 = vmatpush1.bf16.msra.mxu0 %v1353
    %1800 = vmatprep.subr.bf16.mxu0 %v1350
    %1801 = vmatpush1.bf16.msra.mxu0 %v1349
    %1802 = vmatprep.subr.bf16.mxu0 %v1346
    %1803 = vmatpush1.bf16.msra.mxu0 %v1345
    %1804 = vmatprep.subr.bf16.mxu0 %v1406
    %1805 = vmatpush2.bf16.msra.mxu0 %v1405
    %1806 = vmatprep.subr.bf16.mxu0 %v1402
    %1807 = vmatpush2.bf16.msra.mxu0 %v1401
    %1808 = vmatprep.subr.bf16.mxu0 %v1398
    %1809 = vmatpush2.bf16.msra.mxu0 %v1397
    %1810 = vmatprep.subr.bf16.mxu0 %v1394
    %1811 = vmatpush2.bf16.msra.mxu0 %v1393
    %1812 = vmatprep.subr.bf16.mxu0 %v1390
    %1813 = vmatpush2.bf16.msra.mxu0 %v1389
    %1814 = vmatprep.subr.bf16.mxu0 %v1386
    %1815 = vmatpush2.bf16.msra.mxu0 %v1385
    %1816 = vmatprep.subr.bf16.mxu0 %v1382
    %1817 = vmatpush2.bf16.msra.mxu0 %v1381
    %1818 = vmatprep.subr.bf16.mxu0 %v1378
    %1819 = vmatpush2.bf16.msra.mxu0 %v1377
    %1820 = vmatprep.mubr.bf16.mxu0 %v106
    %1821 = vmatmul.mubr.bf16.gmra.mxu0 %v105
    %v1822 = vpop.f32.mrf.mxu0
    %v1823 = vadd.f32 %v1782, %v1822
    %v1824 = vpop.f32.mrf.mxu0
    %v1825 = vadd.f32 %v1784, %v1824
    %v1826 = vpop.f32.mrf.mxu0
    %v1827 = vpop.f32.mrf.mxu0
    %1828 = vdwg.mxu0
    %1829 = vmatprep.subr.bf16.mxu0 %v1184
    %1830 = vmatpush1.bf16.msra.mxu0 %v1183
    %1831 = vmatprep.subr.bf16.mxu0 %v1180
    %1832 = vmatpush1.bf16.msra.mxu0 %v1179
    %1833 = vmatprep.subr.bf16.mxu0 %v1176
    %1834 = vmatpush1.bf16.msra.mxu0 %v1175
    %1835 = vmatprep.subr.bf16.mxu0 %v1172
    %1836 = vmatpush1.bf16.msra.mxu0 %v1171
    %1837 = vmatprep.subr.bf16.mxu0 %v1168
    %1838 = vmatpush1.bf16.msra.mxu0 %v1167
    %1839 = vmatprep.subr.bf16.mxu0 %v1164
    %1840 = vmatpush1.bf16.msra.mxu0 %v1163
    %1841 = vmatprep.subr.bf16.mxu0 %v1160
    %1842 = vmatpush1.bf16.msra.mxu0 %v1159
    %1843 = vmatprep.subr.bf16.mxu0 %v1156
    %1844 = vmatpush1.bf16.msra.mxu0 %v1155
    %1845 = vmatprep.subr.bf16.mxu0 %v1216
    %1846 = vmatpush2.bf16.msra.mxu0 %v1215
    %1847 = vmatprep.subr.bf16.mxu0 %v1212
    %1848 = vmatpush2.bf16.msra.mxu0 %v1211
    %1849 = vmatprep.subr.bf16.mxu0 %v1208
    %1850 = vmatpush2.bf16.msra.mxu0 %v1207
    %1851 = vmatprep.subr.bf16.mxu0 %v1204
    %1852 = vmatpush2.bf16.msra.mxu0 %v1203
    %1853 = vmatprep.subr.bf16.mxu0 %v1200
    %1854 = vmatpush2.bf16.msra.mxu0 %v1199
    %1855 = vmatprep.subr.bf16.mxu0 %v1196
    %1856 = vmatpush2.bf16.msra.mxu0 %v1195
    %1857 = vmatprep.subr.bf16.mxu0 %v1192
    %1858 = vmatpush2.bf16.msra.mxu0 %v1191
    %1859 = vmatprep.subr.bf16.mxu0 %v1188
    %1860 = vmatpush2.bf16.msra.mxu0 %v1187
    %1861 = vmatprep.mubr.bf16.mxu0 %v100
    %1862 = vmatmul.mubr.bf16.gmra.mxu0 %v99
    %v1863 = vpop.f32.mrf.mxu0
    %v1864 = vadd.f32 %v376, %v1863
    %v1865 = vpop.f32.mrf.mxu0
    %v1866 = vadd.f32 %v380, %v1865
    %v1867 = vpop.f32.mrf.mxu0
    %v1868 = vpop.f32.mrf.mxu0
    %1869 = vdwg.mxu0
    %1870 = vmatprep.subr.bf16.mxu0 %v1248
    %1871 = vmatpush1.bf16.msra.mxu0 %v1247
    %1872 = vmatprep.subr.bf16.mxu0 %v1244
    %1873 = vmatpush1.bf16.msra.mxu0 %v1243
    %1874 = vmatprep.subr.bf16.mxu0 %v1240
    %1875 = vmatpush1.bf16.msra.mxu0 %v1239
    %1876 = vmatprep.subr.bf16.mxu0 %v1236
    %1877 = vmatpush1.bf16.msra.mxu0 %v1235
    %1878 = vmatprep.subr.bf16.mxu0 %v1232
    %1879 = vmatpush1.bf16.msra.mxu0 %v1231
    %1880 = vmatprep.subr.bf16.mxu0 %v1228
    %1881 = vmatpush1.bf16.msra.mxu0 %v1227
    %1882 = vmatprep.subr.bf16.mxu0 %v1224
    %1883 = vmatpush1.bf16.msra.mxu0 %v1223
    %1884 = vmatprep.subr.bf16.mxu0 %v1220
    %1885 = vmatpush1.bf16.msra.mxu0 %v1219
    %1886 = vmatprep.subr.bf16.mxu0 %v1280
    %1887 = vmatpush2.bf16.msra.mxu0 %v1279
    %1888 = vmatprep.subr.bf16.mxu0 %v1276
    %1889 = vmatpush2.bf16.msra.mxu0 %v1275
    %1890 = vmatprep.subr.bf16.mxu0 %v1272
    %1891 = vmatpush2.bf16.msra.mxu0 %v1271
    %1892 = vmatprep.subr.bf16.mxu0 %v1268
    %1893 = vmatpush2.bf16.msra.mxu0 %v1267
    %1894 = vmatprep.subr.bf16.mxu0 %v1264
    %1895 = vmatpush2.bf16.msra.mxu0 %v1263
    %1896 = vmatprep.subr.bf16.mxu0 %v1260
    %1897 = vmatpush2.bf16.msra.mxu0 %v1259
    %1898 = vmatprep.subr.bf16.mxu0 %v1256
    %1899 = vmatpush2.bf16.msra.mxu0 %v1255
    %1900 = vmatprep.subr.bf16.mxu0 %v1252
    %1901 = vmatpush2.bf16.msra.mxu0 %v1251
    %1902 = vmatprep.mubr.bf16.mxu0 %v102
    %1903 = vmatmul.mubr.bf16.gmra.mxu0 %v101
    %v1904 = vpop.f32.mrf.mxu0
    %v1905 = vadd.f32 %v1864, %v1904
    %v1906 = vpop.f32.mrf.mxu0
    %v1907 = vadd.f32 %v1866, %v1906
    %v1908 = vpop.f32.mrf.mxu0
    %v1909 = vpop.f32.mrf.mxu0
    %1910 = vdwg.mxu0
    %1911 = vmatprep.subr.bf16.mxu0 %v1312
    %1912 = vmatpush1.bf16.msra.mxu0 %v1311
    %1913 = vmatprep.subr.bf16.mxu0 %v1308
    %1914 = vmatpush1.bf16.msra.mxu0 %v1307
    %1915 = vmatprep.subr.bf16.mxu0 %v1304
    %1916 = vmatpush1.bf16.msra.mxu0 %v1303
    %1917 = vmatprep.subr.bf16.mxu0 %v1300
    %1918 = vmatpush1.bf16.msra.mxu0 %v1299
    %1919 = vmatprep.subr.bf16.mxu0 %v1296
    %1920 = vmatpush1.bf16.msra.mxu0 %v1295
    %1921 = vmatprep.subr.bf16.mxu0 %v1292
    %1922 = vmatpush1.bf16.msra.mxu0 %v1291
    %1923 = vmatprep.subr.bf16.mxu0 %v1288
    %1924 = vmatpush1.bf16.msra.mxu0 %v1287
    %1925 = vmatprep.subr.bf16.mxu0 %v1284
    %1926 = vmatpush1.bf16.msra.mxu0 %v1283
    %1927 = vmatprep.subr.bf16.mxu0 %v1344
    %1928 = vmatpush2.bf16.msra.mxu0 %v1343
    %1929 = vmatprep.subr.bf16.mxu0 %v1340
    %1930 = vmatpush2.bf16.msra.mxu0 %v1339
    %1931 = vmatprep.subr.bf16.mxu0 %v1336
    %1932 = vmatpush2.bf16.msra.mxu0 %v1335
    %1933 = vmatprep.subr.bf16.mxu0 %v1332
    %1934 = vmatpush2.bf16.msra.mxu0 %v1331
    %1935 = vmatprep.subr.bf16.mxu0 %v1328
    %1936 = vmatpush2.bf16.msra.mxu0 %v1327
    %1937 = vmatprep.subr.bf16.mxu0 %v1324
    %1938 = vmatpush2.bf16.msra.mxu0 %v1323
    %1939 = vmatprep.subr.bf16.mxu0 %v1320
    %1940 = vmatpush2.bf16.msra.mxu0 %v1319
    %1941 = vmatprep.subr.bf16.mxu0 %v1316
    %1942 = vmatpush2.bf16.msra.mxu0 %v1315
    %1943 = vmatprep.mubr.bf16.mxu0 %v104
    %1944 = vmatmul.mubr.bf16.gmra.mxu0 %v103
    %v1945 = vpop.f32.mrf.mxu0
    %v1946 = vadd.f32 %v1905, %v1945
    %v1947 = vpop.f32.mrf.mxu0
    %v1948 = vadd.f32 %v1907, %v1947
    %v1949 = vpop.f32.mrf.mxu0
    %v1950 = vpop.f32.mrf.mxu0
    %1951 = vdwg.mxu0
    %1952 = vmatprep.subr.bf16.mxu0 %v1376
    %1953 = vmatpush1.bf16.msra.mxu0 %v1375
    %1954 = vmatprep.subr.bf16.mxu0 %v1372
    %1955 = vmatpush1.bf16.msra.mxu0 %v1371
    %1956 = vmatprep.subr.bf16.mxu0 %v1368
    %1957 = vmatpush1.bf16.msra.mxu0 %v1367
    %1958 = vmatprep.subr.bf16.mxu0 %v1364
    %1959 = vmatpush1.bf16.msra.mxu0 %v1363
    %1960 = vmatprep.subr.bf16.mxu0 %v1360
    %1961 = vmatpush1.bf16.msra.mxu0 %v1359
    %1962 = vmatprep.subr.bf16.mxu0 %v1356
    %1963 = vmatpush1.bf16.msra.mxu0 %v1355
    %1964 = vmatprep.subr.bf16.mxu0 %v1352
    %1965 = vmatpush1.bf16.msra.mxu0 %v1351
    %1966 = vmatprep.subr.bf16.mxu0 %v1348
    %1967 = vmatpush1.bf16.msra.mxu0 %v1347
    %1968 = vmatprep.subr.bf16.mxu0 %v1408
    %1969 = vmatpush2.bf16.msra.mxu0 %v1407
    %1970 = vmatprep.subr.bf16.mxu0 %v1404
    %1971 = vmatpush2.bf16.msra.mxu0 %v1403
    %1972 = vmatprep.subr.bf16.mxu0 %v1400
    %1973 = vmatpush2.bf16.msra.mxu0 %v1399
    %1974 = vmatprep.subr.bf16.mxu0 %v1396
    %1975 = vmatpush2.bf16.msra.mxu0 %v1395
    %1976 = vmatprep.subr.bf16.mxu0 %v1392
    %1977 = vmatpush2.bf16.msra.mxu0 %v1391
    %1978 = vmatprep.subr.bf16.mxu0 %v1388
    %1979 = vmatpush2.bf16.msra.mxu0 %v1387
    %1980 = vmatprep.subr.bf16.mxu0 %v1384
    %1981 = vmatpush2.bf16.msra.mxu0 %v1383
    %1982 = vmatprep.subr.bf16.mxu0 %v1380
    %1983 = vmatpush2.bf16.msra.mxu0 %v1379
    %1984 = vmatprep.mubr.bf16.mxu0 %v106
    %1985 = vmatmul.mubr.bf16.gmra.mxu0 %v105
    %v1986 = vpop.f32.mrf.mxu0
    %v1987 = vadd.f32 %v1946, %v1986
    %v1988 = vpop.f32.mrf.mxu0
    %v1989 = vadd.f32 %v1948, %v1988
    %v1990 = vpop.f32.mrf.mxu0
    %v1991 = vpop.f32.mrf.mxu0
    %1992 = vdwg.mxu0
    %v1993 = vmax.f32 %v1823, 0.0
    %v1994 = vmax.f32 %v1825, 0.0
    %v1995 = vmax.f32 %v1987, 0.0
    %v1996 = vmax.f32 %v1989, 0.0
    %v1997 = vpack.c.bf16 %v1993, %v1993
    %v1998 = vpack.c.bf16 %v1994, %v1994
    %v1999 = vpack.c.bf16 %v1995, %v1995
    %v2000 = vpack.c.bf16 %v1996, %v1996
    %v2001 = vld [vmem:[#allocation7] sm:$0xf]
    %v2002 = vld [vmem:[#allocation7 + $0x4] sm:$0xf]
    %v2003 = vld [vmem:[#allocation7 + $0x8] sm:$0xf]
    %v2004 = vld [vmem:[#allocation7 + $0xc] sm:$0xf]
    %v2005 = vld [vmem:[#allocation7 + $0x10] sm:$0xf]
    %v2006 = vld [vmem:[#allocation7 + $0x14] sm:$0xf]
    %v2007 = vld [vmem:[#allocation7 + $0x18] sm:$0xf]
    %v2008 = vld [vmem:[#allocation7 + $0x1c] sm:$0xf]
    %v2009 = vld [vmem:[#allocation7 + $0x20] sm:$0xf]
    %v2010 = vld [vmem:[#allocation7 + $0x24] sm:$0xf]
    %v2011 = vld [vmem:[#allocation7 + $0x28] sm:$0xf]
    %v2012 = vld [vmem:[#allocation7 + $0x2c] sm:$0xf]
    %v2013 = vld [vmem:[#allocation7 + $0x30] sm:$0xf]
    %v2014 = vld [vmem:[#allocation7 + $0x34] sm:$0xf]
    %v2015 = vld [vmem:[#allocation7 + $0x38] sm:$0xf]
    %v2016 = vld [vmem:[#allocation7 + $0x3c] sm:$0xf]
    %v2017 = vld [vmem:[#allocation7 + $0x40] sm:$0xf]
    %v2018 = vld [vmem:[#allocation7 + $0x44] sm:$0xf]
    %v2019 = vld [vmem:[#allocation7 + $0x48] sm:$0xf]
    %v2020 = vld [vmem:[#allocation7 + $0x4c] sm:$0xf]
    %v2021 = vld [vmem:[#allocation7 + $0x50] sm:$0xf]
    %v2022 = vld [vmem:[#allocation7 + $0x54] sm:$0xf]
    %v2023 = vld [vmem:[#allocation7 + $0x58] sm:$0xf]
    %v2024 = vld [vmem:[#allocation7 + $0x5c] sm:$0xf]
    %v2025 = vld [vmem:[#allocation7 + $0x60] sm:$0xf]
    %v2026 = vld [vmem:[#allocation7 + $0x64] sm:$0xf]
    %v2027 = vld [vmem:[#allocation7 + $0x68] sm:$0xf]
    %v2028 = vld [vmem:[#allocation7 + $0x6c] sm:$0xf]
    %v2029 = vld [vmem:[#allocation7 + $0x70] sm:$0xf]
    %v2030 = vld [vmem:[#allocation7 + $0x74] sm:$0xf]
    %v2031 = vld [vmem:[#allocation7 + $0x78] sm:$0xf]
    %v2032 = vld [vmem:[#allocation7 + $0x7c] sm:$0xf]
    %v2033 = vld [vmem:[#allocation7 + $0x80] sm:$0xf]
    %v2034 = vld [vmem:[#allocation7 + $0x84] sm:$0xf]
    %v2035 = vld [vmem:[#allocation7 + $0x88] sm:$0xf]
    %v2036 = vld [vmem:[#allocation7 + $0x8c] sm:$0xf]
    %v2037 = vld [vmem:[#allocation7 + $0x90] sm:$0xf]
    %v2038 = vld [vmem:[#allocation7 + $0x94] sm:$0xf]
    %v2039 = vld [vmem:[#allocation7 + $0x98] sm:$0xf]
    %v2040 = vld [vmem:[#allocation7 + $0x9c] sm:$0xf]
    %v2041 = vld [vmem:[#allocation7 + $0xa0] sm:$0xf]
    %v2042 = vld [vmem:[#allocation7 + $0xa4] sm:$0xf]
    %v2043 = vld [vmem:[#allocation7 + $0xa8] sm:$0xf]
    %v2044 = vld [vmem:[#allocation7 + $0xac] sm:$0xf]
    %v2045 = vld [vmem:[#allocation7 + $0xb0] sm:$0xf]
    %v2046 = vld [vmem:[#allocation7 + $0xb4] sm:$0xf]
    %v2047 = vld [vmem:[#allocation7 + $0xb8] sm:$0xf]
    %v2048 = vld [vmem:[#allocation7 + $0xbc] sm:$0xf]
    %v2049 = vld [vmem:[#allocation7 + $0xc0] sm:$0xf]
    %v2050 = vld [vmem:[#allocation7 + $0xc4] sm:$0xf]
    %v2051 = vld [vmem:[#allocation7 + $0xc8] sm:$0xf]
    %v2052 = vld [vmem:[#allocation7 + $0xcc] sm:$0xf]
    %v2053 = vld [vmem:[#allocation7 + $0xd0] sm:$0xf]
    %v2054 = vld [vmem:[#allocation7 + $0xd4] sm:$0xf]
    %v2055 = vld [vmem:[#allocation7 + $0xd8] sm:$0xf]
    %v2056 = vld [vmem:[#allocation7 + $0xdc] sm:$0xf]
    %v2057 = vld [vmem:[#allocation7 + $0xe0] sm:$0xf]
    %v2058 = vld [vmem:[#allocation7 + $0xe4] sm:$0xf]
    %v2059 = vld [vmem:[#allocation7 + $0xe8] sm:$0xf]
    %v2060 = vld [vmem:[#allocation7 + $0xec] sm:$0xf]
    %v2061 = vld [vmem:[#allocation7 + $0xf0] sm:$0xf]
    %v2062 = vld [vmem:[#allocation7 + $0xf4] sm:$0xf]
    %v2063 = vld [vmem:[#allocation7 + $0xf8] sm:$0xf]
    %v2064 = vld [vmem:[#allocation7 + $0xfc] sm:$0xf]
    %v2065 = vld [vmem:[%s4] sm:$0x1]
    %v2067 = vlaneseq
    %v2068 = vshrl.u32 %v2067, 7
    %v2069 = vsub.s32 0, %v2068
    %v2070 = vrot.slane %v2065, %v2069
    %v2136 = vunpack.c.l.b16 %v2001
    %v2137 = vunpack.c.l.b16 %v2002
    %v2138 = vunpack.c.l.b16 %v2003
    %v2139 = vunpack.c.l.b16 %v2004
    %v2140 = vunpack.c.l.b16 %v2005
    %v2141 = vunpack.c.l.b16 %v2006
    %v2142 = vunpack.c.l.b16 %v2007
    %v2143 = vunpack.c.l.b16 %v2008
    %v2144 = vunpack.c.l.b16 %v2009
    %v2145 = vunpack.c.l.b16 %v2010
    %v2146 = vunpack.c.l.b16 %v2011
    %v2147 = vunpack.c.l.b16 %v2012
    %v2148 = vunpack.c.l.b16 %v2013
    %v2149 = vunpack.c.l.b16 %v2014
    %v2150 = vunpack.c.l.b16 %v2015
    %v2151 = vunpack.c.l.b16 %v2016
    %v2152 = vunpack.c.l.b16 %v2017
    %v2153 = vunpack.c.l.b16 %v2018
    %v2154 = vunpack.c.l.b16 %v2019
    %v2155 = vunpack.c.l.b16 %v2020
    %v2156 = vunpack.c.l.b16 %v2021
    %v2157 = vunpack.c.l.b16 %v2022
    %v2158 = vunpack.c.l.b16 %v2023
    %v2159 = vunpack.c.l.b16 %v2024
    %v2160 = vunpack.c.l.b16 %v2025
    %v2161 = vunpack.c.l.b16 %v2026
    %v2162 = vunpack.c.l.b16 %v2027
    %v2163 = vunpack.c.l.b16 %v2028
    %v2164 = vunpack.c.l.b16 %v2029
    %v2165 = vunpack.c.l.b16 %v2030
    %v2166 = vunpack.c.l.b16 %v2031
    %v2167 = vunpack.c.l.b16 %v2032
    %v2168 = vunpack.c.l.b16 %v2033
    %v2169 = vunpack.c.l.b16 %v2034
    %v2170 = vunpack.c.l.b16 %v2035
    %v2171 = vunpack.c.l.b16 %v2036
    %v2172 = vunpack.c.l.b16 %v2037
    %v2173 = vunpack.c.l.b16 %v2038
    %v2174 = vunpack.c.l.b16 %v2039
    %v2175 = vunpack.c.l.b16 %v2040
    %v2176 = vunpack.c.l.b16 %v2041
    %v2177 = vunpack.c.l.b16 %v2042
    %v2178 = vunpack.c.l.b16 %v2043
    %v2179 = vunpack.c.l.b16 %v2044
    %v2180 = vunpack.c.l.b16 %v2045
    %v2181 = vunpack.c.l.b16 %v2046
    %v2182 = vunpack.c.l.b16 %v2047
    %v2183 = vunpack.c.l.b16 %v2048
    %v2184 = vunpack.c.l.b16 %v2049
    %v2185 = vunpack.c.l.b16 %v2050
    %v2186 = vunpack.c.l.b16 %v2051
    %v2187 = vunpack.c.l.b16 %v2052
    %v2188 = vunpack.c.l.b16 %v2053
    %v2189 = vunpack.c.l.b16 %v2054
    %v2190 = vunpack.c.l.b16 %v2055
    %v2191 = vunpack.c.l.b16 %v2056
    %v2192 = vunpack.c.l.b16 %v2057
    %v2193 = vunpack.c.l.b16 %v2058
    %v2194 = vunpack.c.l.b16 %v2059
    %v2195 = vunpack.c.l.b16 %v2060
    %v2196 = vunpack.c.l.b16 %v2061
    %v2197 = vunpack.c.l.b16 %v2062
    %v2198 = vunpack.c.l.b16 %v2063
    %v2199 = vunpack.c.l.b16 %v2064
    %v2200 = vpack.c.b16 %v2137, %v2136
    %v2201 = vpack.c.b16 %v2139, %v2138
    %v2202 = vpack.c.b16 %v2141, %v2140
    %v2203 = vpack.c.b16 %v2143, %v2142
    %v2204 = vpack.c.b16 %v2145, %v2144
    %v2205 = vpack.c.b16 %v2147, %v2146
    %v2206 = vpack.c.b16 %v2149, %v2148
    %v2207 = vpack.c.b16 %v2151, %v2150
    %v2208 = vpack.c.b16 %v2153, %v2152
    %v2209 = vpack.c.b16 %v2155, %v2154
    %v2210 = vpack.c.b16 %v2157, %v2156
    %v2211 = vpack.c.b16 %v2159, %v2158
    %v2212 = vpack.c.b16 %v2161, %v2160
    %v2213 = vpack.c.b16 %v2163, %v2162
    %v2214 = vpack.c.b16 %v2165, %v2164
    %v2215 = vpack.c.b16 %v2167, %v2166
    %v2216 = vpack.c.b16 %v2169, %v2168
    %v2217 = vpack.c.b16 %v2171, %v2170
    %v2218 = vpack.c.b16 %v2173, %v2172
    %v2219 = vpack.c.b16 %v2175, %v2174
    %v2220 = vpack.c.b16 %v2177, %v2176
    %v2221 = vpack.c.b16 %v2179, %v2178
    %v2222 = vpack.c.b16 %v2181, %v2180
    %v2223 = vpack.c.b16 %v2183, %v2182
    %v2224 = vpack.c.b16 %v2185, %v2184
    %v2225 = vpack.c.b16 %v2187, %v2186
    %v2226 = vpack.c.b16 %v2189, %v2188
    %v2227 = vpack.c.b16 %v2191, %v2190
    %v2228 = vpack.c.b16 %v2193, %v2192
    %v2229 = vpack.c.b16 %v2195, %v2194
    %v2230 = vpack.c.b16 %v2197, %v2196
    %v2231 = vpack.c.b16 %v2199, %v2198
    %2264 = vmatprep.subr.bf16.mxu0 0
    %2265 = vmatpush1.bf16.msra.mxu0 %v2207
    %2266 = vmatprep.subr.bf16.mxu0 0
    %2267 = vmatpush1.bf16.msra.mxu0 %v2206
    %2268 = vmatprep.subr.bf16.mxu0 0
    %2269 = vmatpush1.bf16.msra.mxu0 %v2205
    %2270 = vmatprep.subr.bf16.mxu0 0
    %2271 = vmatpush1.bf16.msra.mxu0 %v2204
    %2272 = vmatprep.subr.bf16.mxu0 0
    %2273 = vmatpush1.bf16.msra.mxu0 %v2203
    %2274 = vmatprep.subr.bf16.mxu0 0
    %2275 = vmatpush1.bf16.msra.mxu0 %v2202
    %2276 = vmatprep.subr.bf16.mxu0 0
    %2277 = vmatpush1.bf16.msra.mxu0 %v2201
    %2278 = vmatprep.subr.bf16.mxu0 0
    %2279 = vmatpush1.bf16.msra.mxu0 %v2200
    %2280 = vmatprep.subr.bf16.mxu0 0
    %2281 = vmatpush2.bf16.msra.mxu0 %v2215
    %2282 = vmatprep.subr.bf16.mxu0 0
    %2283 = vmatpush2.bf16.msra.mxu0 %v2214
    %2284 = vmatprep.subr.bf16.mxu0 0
    %2285 = vmatpush2.bf16.msra.mxu0 %v2213
    %2286 = vmatprep.subr.bf16.mxu0 0
    %2287 = vmatpush2.bf16.msra.mxu0 %v2212
    %2288 = vmatprep.subr.bf16.mxu0 0
    %2289 = vmatpush2.bf16.msra.mxu0 %v2211
    %2290 = vmatprep.subr.bf16.mxu0 0
    %2291 = vmatpush2.bf16.msra.mxu0 %v2210
    %2292 = vmatprep.subr.bf16.mxu0 0
    %2293 = vmatpush2.bf16.msra.mxu0 %v2209
    %2294 = vmatprep.subr.bf16.mxu0 0
    %2295 = vmatpush2.bf16.msra.mxu0 %v2208
    %2296 = vmatprep.mubr.bf16.mxu0 %v1998
    %2297 = vmatmul.mubr.bf16.gmra.mxu0 %v1997
    %v2298 = vpop.f32.mrf.mxu0
    %v2299 = vadd.f32 %v2070, %v2298
    %v2300 = vpop.f32.mrf.mxu0
    %v2301 = vpop.f32.mrf.mxu0
    %v2302 = vpop.f32.mrf.mxu0
    %2303 = vdwg.mxu0
    %2304 = vmatprep.subr.bf16.mxu0 0
    %2305 = vmatpush1.bf16.msra.mxu0 %v2223
    %2306 = vmatprep.subr.bf16.mxu0 0
    %2307 = vmatpush1.bf16.msra.mxu0 %v2222
    %2308 = vmatprep.subr.bf16.mxu0 0
    %2309 = vmatpush1.bf16.msra.mxu0 %v2221
    %2310 = vmatprep.subr.bf16.mxu0 0
    %2311 = vmatpush1.bf16.msra.mxu0 %v2220
    %2312 = vmatprep.subr.bf16.mxu0 0
    %2313 = vmatpush1.bf16.msra.mxu0 %v2219
    %2314 = vmatprep.subr.bf16.mxu0 0
    %2315 = vmatpush1.bf16.msra.mxu0 %v2218
    %2316 = vmatprep.subr.bf16.mxu0 0
    %2317 = vmatpush1.bf16.msra.mxu0 %v2217
    %2318 = vmatprep.subr.bf16.mxu0 0
    %2319 = vmatpush1.bf16.msra.mxu0 %v2216
    %2320 = vmatprep.subr.bf16.mxu0 0
    %2321 = vmatpush2.bf16.msra.mxu0 %v2231
    %2322 = vmatprep.subr.bf16.mxu0 0
    %2323 = vmatpush2.bf16.msra.mxu0 %v2230
    %2324 = vmatprep.subr.bf16.mxu0 0
    %2325 = vmatpush2.bf16.msra.mxu0 %v2229
    %2326 = vmatprep.subr.bf16.mxu0 0
    %2327 = vmatpush2.bf16.msra.mxu0 %v2228
    %2328 = vmatprep.subr.bf16.mxu0 0
    %2329 = vmatpush2.bf16.msra.mxu0 %v2227
    %2330 = vmatprep.subr.bf16.mxu0 0
    %2331 = vmatpush2.bf16.msra.mxu0 %v2226
    %2332 = vmatprep.subr.bf16.mxu0 0
    %2333 = vmatpush2.bf16.msra.mxu0 %v2225
    %2334 = vmatprep.subr.bf16.mxu0 0
    %2335 = vmatpush2.bf16.msra.mxu0 %v2224
    %2336 = vmatprep.mubr.bf16.mxu0 %v2000
    %2337 = vmatmul.mubr.bf16.gmra.mxu0 %v1999
    %v2338 = vpop.f32.mrf.mxu0
    %v2339 = vadd.f32 %v2299, %v2338
    %v2340 = vpop.f32.mrf.mxu0
    %v2341 = vpop.f32.mrf.mxu0
    %v2342 = vpop.f32.mrf.mxu0
    %2343 = vdwg.mxu0
    %v2344 = vmax.f32 %v2339, 0.0
    %v2345 = vpack.c.bf16 %v2344, %v2344
    %v2346 = vld [vmem:[#allocation9] sm:$0xf]
    %v2347 = vld [vmem:[#allocation9 + $0x4] sm:$0xf]
    %v2348 = vld [vmem:[#allocation9 + $0x8] sm:$0xf]
    %v2349 = vld [vmem:[#allocation9 + $0xc] sm:$0xf]
    %v2350 = vld [vmem:[#allocation9 + $0x10] sm:$0xf]
    %v2351 = vld [vmem:[#allocation9 + $0x14] sm:$0xf]
    %v2352 = vld [vmem:[#allocation9 + $0x18] sm:$0xf]
    %v2353 = vld [vmem:[#allocation9 + $0x1c] sm:$0xf]
    %v2354 = vld [vmem:[#allocation9 + $0x20] sm:$0xf]
    %v2355 = vld [vmem:[#allocation9 + $0x24] sm:$0xf]
    %v2356 = vld [vmem:[#allocation9 + $0x28] sm:$0xf]
    %v2357 = vld [vmem:[#allocation9 + $0x2c] sm:$0xf]
    %v2358 = vld [vmem:[#allocation9 + $0x30] sm:$0xf]
    %v2359 = vld [vmem:[#allocation9 + $0x34] sm:$0xf]
    %v2360 = vld [vmem:[#allocation9 + $0x38] sm:$0xf]
    %v2361 = vld [vmem:[#allocation9 + $0x3c] sm:$0xf]
    %v2362 = vld [vmem:[%s6] sm:$0x1]
    %v2364 = vlaneseq
    %v2365 = vshrl.u32 %v2364, 7
    %v2366 = vsub.s32 0, %v2365
    %v2367 = vrot.slane %v2362, %v2366
    %v2385 = vunpack.c.l.b16 %v2346
    %v2386 = vunpack.c.l.b16 %v2347
    %v2387 = vunpack.c.l.b16 %v2348
    %v2388 = vunpack.c.l.b16 %v2349
    %v2389 = vunpack.c.l.b16 %v2350
    %v2390 = vunpack.c.l.b16 %v2351
    %v2391 = vunpack.c.l.b16 %v2352
    %v2392 = vunpack.c.l.b16 %v2353
    %v2393 = vunpack.c.l.b16 %v2354
    %v2394 = vunpack.c.l.b16 %v2355
    %v2395 = vunpack.c.l.b16 %v2356
    %v2396 = vunpack.c.l.b16 %v2357
    %v2397 = vunpack.c.l.b16 %v2358
    %v2398 = vunpack.c.l.b16 %v2359
    %v2399 = vunpack.c.l.b16 %v2360
    %v2400 = vunpack.c.l.b16 %v2361
    %v2401 = vpack.c.b16 %v2386, %v2385
    %v2402 = vpack.c.b16 %v2388, %v2387
    %v2403 = vpack.c.b16 %v2390, %v2389
    %v2404 = vpack.c.b16 %v2392, %v2391
    %v2405 = vpack.c.b16 %v2394, %v2393
    %v2406 = vpack.c.b16 %v2396, %v2395
    %v2407 = vpack.c.b16 %v2398, %v2397
    %v2408 = vpack.c.b16 %v2400, %v2399
    %2417 = vmatprep.subr.bf16.mxu0 0
    %2418 = vmatpush1.bf16.msra.mxu0 %v2408
    %2419 = vmatprep.subr.bf16.mxu0 0
    %2420 = vmatpush1.bf16.msra.mxu0 %v2407
    %2421 = vmatprep.subr.bf16.mxu0 0
    %2422 = vmatpush1.bf16.msra.mxu0 %v2406
    %2423 = vmatprep.subr.bf16.mxu0 0
    %2424 = vmatpush1.bf16.msra.mxu0 %v2405
    %2425 = vmatprep.subr.bf16.mxu0 0
    %2426 = vmatpush1.bf16.msra.mxu0 %v2404
    %2427 = vmatprep.subr.bf16.mxu0 0
    %2428 = vmatpush1.bf16.msra.mxu0 %v2403
    %2429 = vmatprep.subr.bf16.mxu0 0
    %2430 = vmatpush1.bf16.msra.mxu0 %v2402
    %2431 = vmatprep.subr.bf16.mxu0 0
    %2432 = vmatpush1.bf16.msra.mxu0 %v2401
    %2433 = vmatprep.subr.bf16.mxu0 0
    %2434 = vmatpush2.bf16.msra.mxu0 0
    %2435 = vmatprep.subr.bf16.mxu0 0
    %2436 = vmatpush2.bf16.msra.mxu0 0
    %2437 = vmatprep.subr.bf16.mxu0 0
    %2438 = vmatpush2.bf16.msra.mxu0 0
    %2439 = vmatprep.subr.bf16.mxu0 0
    %2440 = vmatpush2.bf16.msra.mxu0 0
    %2441 = vmatprep.subr.bf16.mxu0 0
    %2442 = vmatpush2.bf16.msra.mxu0 0
    %2443 = vmatprep.subr.bf16.mxu0 0
    %2444 = vmatpush2.bf16.msra.mxu0 0
    %2445 = vmatprep.subr.bf16.mxu0 0
    %2446 = vmatpush2.bf16.msra.mxu0 0
    %2447 = vmatprep.subr.bf16.mxu0 0
    %2448 = vmatpush2.bf16.msra.mxu0 0
    %2449 = vmatprep.mubr.bf16.mxu0 0
    %2450 = vmatmul.mubr.bf16.gmra.mxu0 %v2345
    %v2451 = vpop.f32.mrf.mxu0
    %v2452 = vadd.f32 %v2367, %v2451
    %v2453 = vpop.f32.mrf.mxu0
    %v2454 = vpop.f32.mrf.mxu0
    %v2455 = vpop.f32.mrf.mxu0
    %2456 = vdwg.mxu0
    %v2457 = vpack.c.bf16 %v2452, %v2452
    %2458 = vst [vmem:[%s7] sm:$0xf] %v2457
    // Predicated region
    $region50: #{fcn_forward.1} parent=1 // pred_check
      _
    $region51: #{fcn_forward.1} parent=1 // pred_check_branch
      %2460 = sbr.rel (0) target = $region53
    $region52: #{fcn_forward.1} parent=1 // pred_region
      _
    $region53: #{fcn_forward.1} parent=1 // pred_fallthru
      _
    // Predicated region
    $region54: #{fcn_forward.1} parent=1 // pred_check
      _
    $region55: #{fcn_forward.1} parent=1 // pred_check_branch
      %2462 = sbr.rel (0) target = $region57
    $region56: #{fcn_forward.1} parent=1 // pred_region
      _
    $region57: #{fcn_forward.1} parent=1 // pred_fallthru
      _
    %2463 = vsyncpa [#allocation3], 1
    %2464 = vsyncpa [#allocation5], 1
    %2465 = vsyncpa [#allocation8], 1

</llo_original>
